<compile_context>
chip_gen: v6e
topology: v6e:2x2x1
jax: 0.10.0
libtpu: 0.0.40
codegen_flags: <defaults>
</compile_context>

<pallas_src>
import functools

import jax
import jax.numpy as jnp
from jax.experimental import pallas as pl
from jax.experimental.pallas import tpu as pltpu


# ----------------------------------------------------------------------------
# Fused Bottleneck kernel (one grid step == one batch image)
# ----------------------------------------------------------------------------
def _bottleneck_kernel(x_ref, w1_ref, s1_ref, b1_ref,
                       w2_ref, s2_ref, b2_ref,
                       w3_ref, s3_ref, b3_ref,
                       o_ref, pad_ref):
    H = o_ref.shape[1]

    x_p = x_ref[0]                                       # (H, W*Cin), lane-dense

    # --- conv1 1x1 + BN + ReLU ----------------------------------------------
    # Block-diagonal packed weight directly emits the W-padded packed row
    # layout (H, (W+2)*Cmid); pad columns have scale=shift=0 so they stay 0.
    h1 = jnp.dot(x_p, w1_ref[...], preferred_element_type=jnp.float32)
    h1 = jnp.maximum(h1 * s1_ref[...] + b1_ref[...], 0.0)   # (H, (W+2)*Cmid)

    # --- conv2 3x3 (pad=1) + BN + ReLU ---------------------------------------
    # H-direction halo: two zero rows around h1 in a tiny VMEM scratch.
    zrow = jnp.zeros((1, pad_ref.shape[1]), jnp.float32)
    pad_ref[0:1, :] = zrow
    pad_ref[H + 1:H + 2, :] = zrow
    pad_ref[1:H + 1, :] = h1
    # One matmul per kernel row dy against a precomputed band matrix: the 9
    # taps collapse into 3 MXU passes with K=(W+2)*Cmid.
    h2 = jnp.dot(pad_ref[0:H, :], w2_ref[0], preferred_element_type=jnp.float32)
    h2 = h2 + jnp.dot(pad_ref[1:H + 1, :], w2_ref[1],
                      preferred_element_type=jnp.float32)
    h2 = h2 + jnp.dot(pad_ref[2:H + 2, :], w2_ref[2],
                      preferred_element_type=jnp.float32)
    h2 = jnp.maximum(h2 * s2_ref[...] + b2_ref[...], 0.0)   # (H, W*Cmid)

    # --- conv3 1x1 + BN -------------------------------------------------------
    h3 = jnp.dot(h2, w3_ref[...], preferred_element_type=jnp.float32)
    h3 = h3 * s3_ref[...] + b3_ref[...]                      # (H, W*Cout)

    # --- identity shortcut + ReLU; output store is lane-dense (W*Cout lanes) --
    o_ref[...] = jnp.maximum(h3 + x_p, 0.0)[None].astype(o_ref.dtype)


# ----------------------------------------------------------------------------
# Structured-weight packing (plain JAX, done in the wrapper)
# ----------------------------------------------------------------------------
def _pack_pointwise(w, W, pad=False):
    """1x1-conv weight (Cin, Cout) -> packed block matrix.

    pad=False: block-diagonal (W*Cin, W*Cout), maps packed rows (H, W*Cin) ->
               (H, W*Cout).
    pad=True : additionally shifts each output pixel one slot right and adds a
               zero pixel column on both ends -> (W*Cin, (W+2)*Cout).
    """
    cin, cout = w.shape
    sel = jnp.eye(W, W + 2, k=1, dtype=w.dtype) if pad else jnp.eye(W, dtype=w.dtype)
    return (sel[:, None, :, None] * w[None, :, None, :]).reshape(
        W * cin, sel.shape[1] * cout)


def _pack_conv3x3_bands(w, W):
    """3x3 conv weight (3, 3, Cin, Cout) -> (3, (W+2)*Cin, W*Cout) band matrices.

    band[dy] maps a W-padded packed input row to the packed output row, summing
    the three dx taps inside the matmul contraction.
    """
    _, _, cin, cout = w.shape
    bands = []
    for dy in range(3):
        terms = []
        for dx in range(3):
            sel = jnp.eye(W + 2, W, k=-dx, dtype=w.dtype)  # 1 iff jp == j + dx
            terms.append((sel[:, None, :, None] * w[dy, dx][None, :, None, :])
                         .reshape((W + 2) * cin, W * cout))
        bands.append(terms[0] + terms[1] + terms[2])
    return jnp.stack(bands)


# ----------------------------------------------------------------------------
# Forward wrapper (NCHW in / NCHW out, like the PyTorch module)
# ----------------------------------------------------------------------------
def bottleneck_forward(params, x_nchw):
    N, cin, H, W = x_nchw.shape
    cmid = params["w1"].shape[1]
    cout = params["w3"].shape[1]
    if cin != cout:
        raise ValueError("identity shortcut requires inplanes == planes * 4")

    # NCHW -> channel-packed rows (N, H, W*C); lane axis is W*C (lane-dense).
    x_p = jnp.transpose(x_nchw, (0, 2, 3, 1)).reshape(N, H, W * cin)

    # Packed / structured weights + folded-BN scale/shift (tiny, plain JAX).
    w1p = _pack_pointwise(params["w1"], W, pad=True)       # (W*Cin, (W+2)*Cmid)
    zc = jnp.zeros((cmid,), jnp.float32)
    s1p = jnp.concatenate([zc, jnp.tile(params["s1"], W), zc]).reshape(1, -1)
    b1p = jnp.concatenate([zc, jnp.tile(params["b1"], W), zc]).reshape(1, -1)

    w2b = _pack_conv3x3_bands(params["w2"], W)             # (3, (W+2)*Cmid, W*Cmid)
    s2p = jnp.tile(params["s2"], W).reshape(1, -1)
    b2p = jnp.tile(params["b2"], W).reshape(1, -1)

    w3p = _pack_pointwise(params["w3"], W, pad=False)      # (W*Cmid, W*Cout)
    s3p = jnp.tile(params["s3"], W).reshape(1, -1)
    b3p = jnp.tile(params["b3"], W).reshape(1, -1)

    out_p = pl.pallas_call(
        _bottleneck_kernel,
        out_shape=jax.ShapeDtypeStruct((N, H, W * cout), jnp.float32),
        grid=(N,),
        in_specs=[
            pl.BlockSpec((1, H, W * cin), lambda n: (n, 0, 0)),
            pl.BlockSpec((W * cin, (W + 2) * cmid), lambda n: (0, 0)),
            pl.BlockSpec((1, (W + 2) * cmid), lambda n: (0, 0)),
            pl.BlockSpec((1, (W + 2) * cmid), lambda n: (0, 0)),
            pl.BlockSpec((3, (W + 2) * cmid, W * cmid), lambda n: (0, 0, 0)),
            pl.BlockSpec((1, W * cmid), lambda n: (0, 0)),
            pl.BlockSpec((1, W * cmid), lambda n: (0, 0)),
            pl.BlockSpec((W * cmid, W * cout), lambda n: (0, 0)),
            pl.BlockSpec((1, W * cout), lambda n: (0, 0)),
            pl.BlockSpec((1, W * cout), lambda n: (0, 0)),
        ],
        out_specs=pl.BlockSpec((1, H, W * cout), lambda n: (n, 0, 0)),
        scratch_shapes=[pltpu.VMEM((H + 2, (W + 2) * cmid), jnp.float32)],
        compiler_params=pltpu.CompilerParams(
            dimension_semantics=("parallel",)),
    )(x_p, w1p, s1p, b1p, w2b, s2p, b2p, w3p, s3p, b3p)

    # packed rows (N, H, W*Cout) -> NCHW
    return jnp.transpose(out_p.reshape(N, H, W, cout), (0, 3, 1, 2))


# ----------------------------------------------------------------------------
# Deterministic synthetic parameters + pure-JAX reference
# ----------------------------------------------------------------------------
def make_bottleneck_params(key, inplanes, planes, eps=1e-5):
    expansion = 4
    cout = planes * expansion
    ks = jax.random.split(key, 15)

    def folded_bn(k0, k1, k2, k3, c):
        gamma = 1.0 + 0.1 * jax.random.normal(k0, (c,), jnp.float32)
        beta = 0.1 * jax.random.normal(k1, (c,), jnp.float32)
        mean = 0.1 * jax.random.normal(k2, (c,), jnp.float32)
        var = 1.0 + 0.1 * jax.nn.softplus(jax.random.normal(k3, (c,), jnp.float32))
        scale = gamma * jax.lax.rsqrt(var + eps)
        shift = beta - mean * scale
        return scale, shift

    w1 = 0.1 * jax.random.normal(ks[0], (inplanes, planes), jnp.float32)
    w2 = 0.1 * jax.random.normal(ks[1], (3, 3, planes, planes), jnp.float32)
    w3 = 0.1 * jax.random.normal(ks[2], (planes, cout), jnp.float32)
    s1, b1 = folded_bn(ks[3], ks[4], ks[5], ks[6], planes)
    s2, b2 = folded_bn(ks[7], ks[8], ks[9], ks[10], planes)
    s3, b3 = folded_bn(ks[11], ks[12], ks[13], ks[14], cout)
    return {"w1": w1, "w2": w2, "w3": w3,
            "s1": s1, "b1": b1, "s2": s2, "b2": b2, "s3": s3, "b3": b3}


def bottleneck_ref(params, x_nchw):
    """Pure-JAX reference (same folded inference-mode BN)."""
    hp = jax.lax.Precision.HIGHEST
    x = jnp.transpose(x_nchw, (0, 2, 3, 1))                  # NHWC
    h = jnp.einsum("nhwc,cd->nhwd", x, params["w1"], precision=hp)
    h = jnp.maximum(h * params["s1"] + params["b1"], 0.0)
    h = jax.lax.conv_general_dilated(
        h, params["w2"], window_strides=(1, 1), padding=((1, 1), (1, 1)),
        dimension_numbers=("NHWC", "HWIO", "NHWC"), precision=hp)
    h = jnp.maximum(h * params["s2"] + params["b2"], 0.0)
    h = jnp.einsum("nhwc,cd->nhwd", h, params["w3"], precision=hp)
    h = h * params["s3"] + params["b3"]
    out = jnp.maximum(h + x, 0.0)
    return jnp.transpose(out, (0, 3, 1, 2))


if __name__ == "__main__":
    # Bottleneck(inplanes=16, planes=4): out channels = planes * 4 = 16
    inplanes, planes = 16, 4
    N, H, W = 2, 16, 16

    key = jax.random.PRNGKey(0)
    kx, kp = jax.random.split(key)
    x = jax.random.normal(kx, (N, inplanes, H, W), jnp.float32)
    params = make_bottleneck_params(kp, inplanes, planes)

    fwd = jax.jit(functools.partial(bottleneck_forward, params))
    out = fwd(x)
    jax.block_until_ready(out)

    assert out.shape == (N, planes * 4, H, W), out.shape
    ref = bottleneck_ref(params, x)
    max_err = float(jnp.max(jnp.abs(out - ref)))
    assert jnp.allclose(out, ref, atol=2e-2, rtol=2e-2), f"max |err| = {max_err}"
    print("KERNEL_OK")
</pallas_src>

<mosaic_0001>
module attributes {stable_mosaic.version = 11 : i64} {
  func.func @_bottleneck_kernel(%arg0: i32, %arg1: memref<1x16x256xf32, #tpu.memory_space<vmem>>, %arg2: memref<256x72xf32, #tpu.memory_space<vmem>>, %arg3: memref<1x72xf32, #tpu.memory_space<vmem>>, %arg4: memref<1x72xf32, #tpu.memory_space<vmem>>, %arg5: memref<3x72x64xf32, #tpu.memory_space<vmem>>, %arg6: memref<1x64xf32, #tpu.memory_space<vmem>>, %arg7: memref<1x64xf32, #tpu.memory_space<vmem>>, %arg8: memref<64x256xf32, #tpu.memory_space<vmem>>, %arg9: memref<1x256xf32, #tpu.memory_space<vmem>>, %arg10: memref<1x256xf32, #tpu.memory_space<vmem>>, %arg11: memref<1x16x256xf32, #tpu.memory_space<vmem>>, %arg12: memref<18x72xf32, #tpu.memory_space<vmem>>) attributes {dimension_semantics = [#tpu.dimension_semantics<parallel>], iteration_bounds = array<i64: 2>, scalar_prefetch = 0 : i64, scratch_operands = 1 : i64, tpu.core_type = #tpu.core_type<tc>, window_params = [{transform_indices = @transform_0, window_bounds = array<i64: 1, 16, 256>}, {pipeline_mode = #tpu.pipeline_mode<synchronous>, transform_indices = @transform_1, window_bounds = array<i64: 256, 72>}, {pipeline_mode = #tpu.pipeline_mode<synchronous>, transform_indices = @transform_2, window_bounds = array<i64: 1, 72>}, {pipeline_mode = #tpu.pipeline_mode<synchronous>, transform_indices = @transform_3, window_bounds = array<i64: 1, 72>}, {pipeline_mode = #tpu.pipeline_mode<synchronous>, transform_indices = @transform_4, window_bounds = array<i64: 3, 72, 64>}, {pipeline_mode = #tpu.pipeline_mode<synchronous>, transform_indices = @transform_5, window_bounds = array<i64: 1, 64>}, {pipeline_mode = #tpu.pipeline_mode<synchronous>, transform_indices = @transform_6, window_bounds = array<i64: 1, 64>}, {pipeline_mode = #tpu.pipeline_mode<synchronous>, transform_indices = @transform_7, window_bounds = array<i64: 64, 256>}, {pipeline_mode = #tpu.pipeline_mode<synchronous>, transform_indices = @transform_8, window_bounds = array<i64: 1, 256>}, {pipeline_mode = #tpu.pipeline_mode<synchronous>, transform_indices = @transform_9, window_bounds = array<i64: 1, 256>}, {transform_indices = @transform_10, window_bounds = array<i64: 1, 16, 256>}]} {
    %c0 = arith.constant 0 : index
    %c0_0 = arith.constant 0 : index
    %c0_1 = arith.constant 0 : index
    %0 = vector.load %arg1[%c0, %c0_0, %c0_1] : memref<1x16x256xf32, #tpu.memory_space<vmem>>, vector<1x16x256xf32>
    %1 = vector.shape_cast %0 : vector<1x16x256xf32> to vector<16x256xf32>
    %c0_2 = arith.constant 0 : index
    %c0_3 = arith.constant 0 : index
    %2 = vector.load %arg2[%c0_2, %c0_3] : memref<256x72xf32, #tpu.memory_space<vmem>>, vector<256x72xf32>
    %cst = arith.constant dense<0.000000e+00> : vector<16x72xf32>
    %3 = tpu.matmul %1, %2, %cst {dimension_numbers = #tpu.dot_dimension_numbers<[1], [0], [0], [1], [0, 0, 1, 1], [], []>} : vector<16x256xf32>, vector<256x72xf32>, vector<16x72xf32> -> vector<16x72xf32>
    %c0_4 = arith.constant 0 : index
    %c0_5 = arith.constant 0 : index
    %4 = vector.load %arg3[%c0_4, %c0_5] : memref<1x72xf32, #tpu.memory_space<vmem>>, vector<1x72xf32>
    %5 = vector.broadcast %4 : vector<1x72xf32> to vector<16x72xf32>
    %6 = arith.mulf %3, %5 : vector<16x72xf32>
    %c0_6 = arith.constant 0 : index
    %c0_7 = arith.constant 0 : index
    %7 = vector.load %arg4[%c0_6, %c0_7] : memref<1x72xf32, #tpu.memory_space<vmem>>, vector<1x72xf32>
    %8 = vector.broadcast %7 : vector<1x72xf32> to vector<16x72xf32>
    %9 = arith.addf %6, %8 : vector<16x72xf32>
    %cst_8 = arith.constant 0.000000e+00 : f32
    %10 = vector.broadcast %cst_8 : f32 to vector<16x72xf32>
    %11 = arith.maximumf %9, %10 : vector<16x72xf32>
    %cst_9 = arith.constant 0.000000e+00 : f32
    %12 = vector.broadcast %cst_9 : f32 to vector<1x72xf32>
    %c0_10 = arith.constant 0 : index
    %c0_11 = arith.constant 0 : index
    %13 = vector.load %arg12[%c0_10, %c0_11] : memref<18x72xf32, #tpu.memory_space<vmem>>, vector<1x72xf32>
    tpu.vector_store %arg12[%c0_10, %c0_11], %12 {strides = array<i32>} : memref<18x72xf32, #tpu.memory_space<vmem>>, vector<1x72xf32>,
    %c17 = arith.constant 17 : index
    %c0_12 = arith.constant 0 : index
    %14 = vector.load %arg12[%c17, %c0_12] : memref<18x72xf32, #tpu.memory_space<vmem>>, vector<1x72xf32>
    tpu.vector_store %arg12[%c17, %c0_12], %12 {strides = array<i32>} : memref<18x72xf32, #tpu.memory_space<vmem>>, vector<1x72xf32>,
    %c1 = arith.constant 1 : index
    %c0_13 = arith.constant 0 : index
    %15 = vector.load %arg12[%c1, %c0_13] : memref<18x72xf32, #tpu.memory_space<vmem>>, vector<16x72xf32>
    tpu.vector_store %arg12[%c1, %c0_13], %11 {strides = array<i32>} : memref<18x72xf32, #tpu.memory_space<vmem>>, vector<16x72xf32>,
    %c0_14 = arith.constant 0 : index
    %c0_15 = arith.constant 0 : index
    %16 = vector.load %arg12[%c0_14, %c0_15] : memref<18x72xf32, #tpu.memory_space<vmem>>, vector<16x72xf32>
    %c0_16 = arith.constant 0 : index
    %c0_17 = arith.constant 0 : index
    %c0_18 = arith.constant 0 : index
    %17 = vector.load %arg5[%c0_16, %c0_17, %c0_18] : memref<3x72x64xf32, #tpu.memory_space<vmem>>, vector<1x72x64xf32>
    %18 = vector.shape_cast %17 : vector<1x72x64xf32> to vector<72x64xf32>
    %cst_19 = arith.constant dense<0.000000e+00> : vector<16x64xf32>
    %19 = tpu.matmul %16, %18, %cst_19 {dimension_numbers = #tpu.dot_dimension_numbers<[1], [0], [0], [1], [0, 0, 1, 1], [], []>} : vector<16x72xf32>, vector<72x64xf32>, vector<16x64xf32> -> vector<16x64xf32>
    %c1_20 = arith.constant 1 : index
    %c0_21 = arith.constant 0 : index
    %20 = vector.load %arg12[%c1_20, %c0_21] : memref<18x72xf32, #tpu.memory_space<vmem>>, vector<16x72xf32>
    %c1_22 = arith.constant 1 : index
    %c0_23 = arith.constant 0 : index
    %c0_24 = arith.constant 0 : index
    %21 = vector.load %arg5[%c1_22, %c0_23, %c0_24] : memref<3x72x64xf32, #tpu.memory_space<vmem>>, vector<1x72x64xf32>
    %22 = vector.shape_cast %21 : vector<1x72x64xf32> to vector<72x64xf32>
    %cst_25 = arith.constant dense<0.000000e+00> : vector<16x64xf32>
    %23 = tpu.matmul %20, %22, %cst_25 {dimension_numbers = #tpu.dot_dimension_numbers<[1], [0], [0], [1], [0, 0, 1, 1], [], []>} : vector<16x72xf32>, vector<72x64xf32>, vector<16x64xf32> -> vector<16x64xf32>
    %24 = arith.addf %19, %23 : vector<16x64xf32>
    %c2 = arith.constant 2 : index
    %c0_26 = arith.constant 0 : index
    %25 = vector.load %arg12[%c2, %c0_26] : memref<18x72xf32, #tpu.memory_space<vmem>>, vector<16x72xf32>
    %c2_27 = arith.constant 2 : index
    %c0_28 = arith.constant 0 : index
    %c0_29 = arith.constant 0 : index
    %26 = vector.load %arg5[%c2_27, %c0_28, %c0_29] : memref<3x72x64xf32, #tpu.memory_space<vmem>>, vector<1x72x64xf32>
    %27 = vector.shape_cast %26 : vector<1x72x64xf32> to vector<72x64xf32>
    %cst_30 = arith.constant dense<0.000000e+00> : vector<16x64xf32>
    %28 = tpu.matmul %25, %27, %cst_30 {dimension_numbers = #tpu.dot_dimension_numbers<[1], [0], [0], [1], [0, 0, 1, 1], [], []>} : vector<16x72xf32>, vector<72x64xf32>, vector<16x64xf32> -> vector<16x64xf32>
    %29 = arith.addf %24, %28 : vector<16x64xf32>
    %c0_31 = arith.constant 0 : index
    %c0_32 = arith.constant 0 : index
    %30 = vector.load %arg6[%c0_31, %c0_32] : memref<1x64xf32, #tpu.memory_space<vmem>>, vector<1x64xf32>
    %31 = vector.broadcast %30 : vector<1x64xf32> to vector<16x64xf32>
    %32 = arith.mulf %29, %31 : vector<16x64xf32>
    %c0_33 = arith.constant 0 : index
    %c0_34 = arith.constant 0 : index
    %33 = vector.load %arg7[%c0_33, %c0_34] : memref<1x64xf32, #tpu.memory_space<vmem>>, vector<1x64xf32>
    %34 = vector.broadcast %33 : vector<1x64xf32> to vector<16x64xf32>
    %35 = arith.addf %32, %34 : vector<16x64xf32>
    %cst_35 = arith.constant 0.000000e+00 : f32
    %36 = vector.broadcast %cst_35 : f32 to vector<16x64xf32>
    %37 = arith.maximumf %35, %36 : vector<16x64xf32>
    %c0_36 = arith.constant 0 : index
    %c0_37 = arith.constant 0 : index
    %38 = vector.load %arg8[%c0_36, %c0_37] : memref<64x256xf32, #tpu.memory_space<vmem>>, vector<64x256xf32>
    %cst_38 = arith.constant dense<0.000000e+00> : vector<16x256xf32>
    %39 = tpu.matmul %37, %38, %cst_38 {dimension_numbers = #tpu.dot_dimension_numbers<[1], [0], [0], [1], [0, 0, 1, 1], [], []>} : vector<16x64xf32>, vector<64x256xf32>, vector<16x256xf32> -> vector<16x256xf32>
    %c0_39 = arith.constant 0 : index
    %c0_40 = arith.constant 0 : index
    %40 = vector.load %arg9[%c0_39, %c0_40] : memref<1x256xf32, #tpu.memory_space<vmem>>, vector<1x256xf32>
    %41 = vector.broadcast %40 : vector<1x256xf32> to vector<16x256xf32>
    %42 = arith.mulf %39, %41 : vector<16x256xf32>
    %c0_41 = arith.constant 0 : index
    %c0_42 = arith.constant 0 : index
    %43 = vector.load %arg10[%c0_41, %c0_42] : memref<1x256xf32, #tpu.memory_space<vmem>>, vector<1x256xf32>
    %44 = vector.broadcast %43 : vector<1x256xf32> to vector<16x256xf32>
    %45 = arith.addf %42, %44 : vector<16x256xf32>
    %46 = arith.addf %45, %1 : vector<16x256xf32>
    %cst_43 = arith.constant 0.000000e+00 : f32
    %47 = vector.broadcast %cst_43 : f32 to vector<16x256xf32>
    %48 = arith.maximumf %46, %47 : vector<16x256xf32>
    %49 = vector.shape_cast %48 : vector<16x256xf32> to vector<1x16x256xf32>
    %c0_44 = arith.constant 0 : index
    %c0_45 = arith.constant 0 : index
    %c0_46 = arith.constant 0 : index
    %50 = vector.load %arg11[%c0_44, %c0_45, %c0_46] : memref<1x16x256xf32, #tpu.memory_space<vmem>>, vector<1x16x256xf32>
    tpu.vector_store %arg11[%c0_44, %c0_45, %c0_46], %49 {strides = array<i32>} : memref<1x16x256xf32, #tpu.memory_space<vmem>>, vector<1x16x256xf32>,
    return
  }
  func.func @transform_0(%arg0: i32) -> (i32, i32, i32) {
    %c0_i32 = arith.constant 0 : i32
    %c0_i32_0 = arith.constant 0 : i32
    %c0_i32_1 = arith.constant 0 : i32
    return %arg0, %c0_i32, %c0_i32_0 : i32, i32, i32
  }
  func.func @transform_1(%arg0: i32) -> (i32, i32) {
    %c0_i32 = arith.constant 0 : i32
    %c0_i32_0 = arith.constant 0 : i32
    %c0_i32_1 = arith.constant 0 : i32
    return %c0_i32, %c0_i32_0 : i32, i32
  }
  func.func @transform_2(%arg0: i32) -> (i32, i32) {
    %c0_i32 = arith.constant 0 : i32
    %c0_i32_0 = arith.constant 0 : i32
    %c0_i32_1 = arith.constant 0 : i32
    return %c0_i32, %c0_i32_0 : i32, i32
  }
  func.func @transform_3(%arg0: i32) -> (i32, i32) {
    %c0_i32 = arith.constant 0 : i32
    %c0_i32_0 = arith.constant 0 : i32
    %c0_i32_1 = arith.constant 0 : i32
    return %c0_i32, %c0_i32_0 : i32, i32
  }
  func.func @transform_4(%arg0: i32) -> (i32, i32, i32) {
    %c0_i32 = arith.constant 0 : i32
    %c0_i32_0 = arith.constant 0 : i32
    %c0_i32_1 = arith.constant 0 : i32
    %c0_i32_2 = arith.constant 0 : i32
    return %c0_i32, %c0_i32_0, %c0_i32_1 : i32, i32, i32
  }
  func.func @transform_5(%arg0: i32) -> (i32, i32) {
    %c0_i32 = arith.constant 0 : i32
    %c0_i32_0 = arith.constant 0 : i32
    %c0_i32_1 = arith.constant 0 : i32
    return %c0_i32, %c0_i32_0 : i32, i32
  }
  func.func @transform_6(%arg0: i32) -> (i32, i32) {
    %c0_i32 = arith.constant 0 : i32
    %c0_i32_0 = arith.constant 0 : i32
    %c0_i32_1 = arith.constant 0 : i32
    return %c0_i32, %c0_i32_0 : i32, i32
  }
  func.func @transform_7(%arg0: i32) -> (i32, i32) {
    %c0_i32 = arith.constant 0 : i32
    %c0_i32_0 = arith.constant 0 : i32
    %c0_i32_1 = arith.constant 0 : i32
    return %c0_i32, %c0_i32_0 : i32, i32
  }
  func.func @transform_8(%arg0: i32) -> (i32, i32) {
    %c0_i32 = arith.constant 0 : i32
    %c0_i32_0 = arith.constant 0 : i32
    %c0_i32_1 = arith.constant 0 : i32
    return %c0_i32, %c0_i32_0 : i32, i32
  }
  func.func @transform_9(%arg0: i32) -> (i32, i32) {
    %c0_i32 = arith.constant 0 : i32
    %c0_i32_0 = arith.constant 0 : i32
    %c0_i32_1 = arith.constant 0 : i32
    return %c0_i32, %c0_i32_0 : i32, i32
  }
  func.func @transform_10(%arg0: i32) -> (i32, i32, i32) {
    %c0_i32 = arith.constant 0 : i32
    %c0_i32_0 = arith.constant 0 : i32
    %c0_i32_1 = arith.constant 0 : i32
    return %arg0, %c0_i32, %c0_i32_0 : i32, i32, i32
  }
}

</mosaic_0001>

<llo_original>
// kernel: tile.26
$region0: #{tile.26}
  #allocation0 [shape = 's32[1]{0}', space=sflag, size = 0x4, scoped, tag = 'scoped memory for tile.26']
  %s0 = inlined_call_operand.vmem [shape: f32[4], index: 0, kind: input, shape index: {}]
  %s1 = inlined_call_operand.vmem [shape: f32[16,4], index: 1, kind: output, shape index: {}]
  // Predicated region
  $region2: #{tile.26} parent=0 // pred_check
    _
  $region3: #{tile.26} parent=0 // pred_check_branch
    %3 = sbr.rel (0) target = $region5
  $region4: #{tile.26} parent=0 // pred_region
    _
  $region5: #{tile.26} parent=0 // pred_fallthru
    _
  %v4 = vld [vmem:[%s0] ss:$0 sm:$0xff]
  %5 = vst [vmem:[%s1] sm:$0xff] %v4
  %s6 = scalar_lea.vmem %s1, 8
  %7 = vst [vmem:[%s6] sm:$0xff] %v4

// kernel: tile.27
$region0: #{tile.27}
  %s0 = inlined_call_operand.vmem [shape: f32[16,4], index: 0, kind: input, shape index: {}]
  %s1 = inlined_call_operand.vmem [shape: f32[64], index: 1, kind: output, shape index: {}]
  $region1: #{tile.27} parent=0
    #allocation0 [shape = 'u8[4096]{0}', space=vmem, size = 0x1000, scoped, tag = 'scoped mem for output reshape']
    %v2 = vld [vmem:[%s0] sm:$0x1]
    %vm3 = vcmask 31744
    %4 = vst.msk [vmem:[#allocation0] sm:$0x1] %vm3, %v2
    %s5 = scalar_lea.vmem %s0, 15
    %v6 = vld [vmem:[%s5] sm:$0x1]
    %7 = vrot.lane.b32.xlu0 %v6, 60
    %v8 = vpop.permute.xlu0 %7
    %vm9 = vcmask 523744
    %10 = vst.msk [vmem:[#allocation0] sm:$0x1] %vm9, %v8
    %s11 = scalar_lea.vmem %s0, 14
    %v12 = vld [vmem:[%s11] sm:$0x1]
    %13 = vrot.lane.b32.xlu0 %v12, 56
    %v14 = vpop.permute.xlu0 %13
    %vm15 = vcmask 490944
    %16 = vst.msk [vmem:[#allocation0] sm:$0x1] %vm15, %v14
    %s17 = scalar_lea.vmem %s0, 13
    %v18 = vld [vmem:[%s17] sm:$0x1]
    %19 = vrot.lane.b32.xlu0 %v18, 52
    %v20 = vpop.permute.xlu0 %19
    %vm21 = vcmask 458144
    %22 = vst.msk [vmem:[#allocation0] sm:$0x1] %vm21, %v20
    %s23 = scalar_lea.vmem %s0, 12
    %v24 = vld [vmem:[%s23] sm:$0x1]
    %25 = vrot.lane.b32.xlu0 %v24, 48
    %v26 = vpop.permute.xlu0 %25
    %vm27 = vcmask 425344
    %28 = vst.msk [vmem:[#allocation0] sm:$0x1] %vm27, %v26
    %s29 = scalar_lea.vmem %s0, 11
    %v30 = vld [vmem:[%s29] sm:$0x1]
    %31 = vrot.lane.b32.xlu0 %v30, 44
    %v32 = vpop.permute.xlu0 %31
    %vm33 = vcmask 392544
    %34 = vst.msk [vmem:[#allocation0] sm:$0x1] %vm33, %v32
    %s35 = scalar_lea.vmem %s0, 10
    %v36 = vld [vmem:[%s35] sm:$0x1]
    %37 = vrot.lane.b32.xlu0 %v36, 40
    %v38 = vpop.permute.xlu0 %37
    %vm39 = vcmask 359744
    %40 = vst.msk [vmem:[#allocation0] sm:$0x1] %vm39, %v38
    %s41 = scalar_lea.vmem %s0, 9
    %v42 = vld [vmem:[%s41] sm:$0x1]
    %43 = vrot.lane.b32.xlu0 %v42, 36
    %v44 = vpop.permute.xlu0 %43
    %vm45 = vcmask 326944
    %46 = vst.msk [vmem:[#allocation0] sm:$0x1] %vm45, %v44
    %s47 = scalar_lea.vmem %s0, 8
    %v48 = vld [vmem:[%s47] sm:$0x1]
    %49 = vrot.lane.b32.xlu0 %v48, 32
    %v50 = vpop.permute.xlu0 %49
    %vm51 = vcmask 294144
    %52 = vst.msk [vmem:[#allocation0] sm:$0x1] %vm51, %v50
    %s53 = scalar_lea.vmem %s0, 7
    %v54 = vld [vmem:[%s53] sm:$0x1]
    %55 = vrot.lane.b32.xlu0 %v54, 28
    %v56 = vpop.permute.xlu0 %55
    %vm57 = vcmask 261344
    %58 = vst.msk [vmem:[#allocation0] sm:$0x1] %vm57, %v56
    %s59 = scalar_lea.vmem %s0, 6
    %v60 = vld [vmem:[%s59] sm:$0x1]
    %61 = vrot.lane.b32.xlu0 %v60, 24
    %v62 = vpop.permute.xlu0 %61
    %vm63 = vcmask 228544
    %64 = vst.msk [vmem:[#allocation0] sm:$0x1] %vm63, %v62
    %s65 = scalar_lea.vmem %s0, 5
    %v66 = vld [vmem:[%s65] sm:$0x1]
    %67 = vrot.lane.b32.xlu0 %v66, 20
    %v68 = vpop.permute.xlu0 %67
    %vm69 = vcmask 195744
    %70 = vst.msk [vmem:[#allocation0] sm:$0x1] %vm69, %v68
    %s71 = scalar_lea.vmem %s0, 4
    %v72 = vld [vmem:[%s71] sm:$0x1]
    %73 = vrot.lane.b32.xlu0 %v72, 16
    %v74 = vpop.permute.xlu0 %73
    %vm75 = vcmask 162944
    %76 = vst.msk [vmem:[#allocation0] sm:$0x1] %vm75, %v74
    %s77 = scalar_lea.vmem %s0, 3
    %v78 = vld [vmem:[%s77] sm:$0x1]
    %79 = vrot.lane.b32.xlu0 %v78, 12
    %v80 = vpop.permute.xlu0 %79
    %vm81 = vcmask 130144
    %82 = vst.msk [vmem:[#allocation0] sm:$0x1] %vm81, %v80
    %s83 = scalar_lea.vmem %s0, 2
    %v84 = vld [vmem:[%s83] sm:$0x1]
    %85 = vrot.lane.b32.xlu0 %v84, 8
    %v86 = vpop.permute.xlu0 %85
    %vm87 = vcmask 97344
    %88 = vst.msk [vmem:[#allocation0] sm:$0x1] %vm87, %v86
    %s89 = scalar_lea.vmem %s0, 1
    %v90 = vld [vmem:[%s89] sm:$0x1]
    %91 = vrot.lane.b32.xlu0 %v90, 4
    %v92 = vpop.permute.xlu0 %91
    %vm93 = vcmask 64544
    %94 = vst.msk [vmem:[#allocation0] sm:$0x1] %vm93, %v92
    %s96 = sshll.u32 1, 1
    %s97 = ssub.s32 %s96, 1
    %v99 = vld [vmem:[#allocation0] sm:%s97]
    %s100 = sshll.u32 1, 1
    %s101 = ssub.s32 %s100, 1
    %102 = vst [vmem:[%s1] sm:%s101] %v99

// kernel: tile.42
$region0: #{tile.42}
  #allocation0 [shape = 's32[1]{0}', space=sflag, size = 0x4, scoped, tag = 'scoped memory for tile.42']
  %s0 = inlined_call_operand.vmem [shape: f32[16], index: 0, kind: input, shape index: {}]
  %s1 = inlined_call_operand.vmem [shape: f32[16,16], index: 1, kind: output, shape index: {}]
  // Predicated region
  $region2: #{tile.42} parent=0 // pred_check
    _
  $region3: #{tile.42} parent=0 // pred_check_branch
    %3 = sbr.rel (0) target = $region5
  $region4: #{tile.42} parent=0 // pred_region
    _
  $region5: #{tile.42} parent=0 // pred_fallthru
    _
  %v4 = vld [vmem:[%s0] ss:$0 sm:$0xff]
  %5 = vst [vmem:[%s1] sm:$0xff] %v4
  %s6 = scalar_lea.vmem %s1, 8
  %7 = vst [vmem:[%s6] sm:$0xff] %v4

// kernel: tile.43
$region0: #{tile.43}
  %s0 = inlined_call_operand.vmem [shape: f32[16,16], index: 0, kind: input, shape index: {}]
  %s1 = inlined_call_operand.vmem [shape: f32[1,256], index: 1, kind: output, shape index: {}]
  $region1: #{tile.43} parent=0
    #allocation0 [shape = 'u8[8192]{0}', space=vmem, size = 0x2000, scoped, tag = 'scoped mem for output reshape']
    %s2 = smov 3
    %v3 = vld [vmem:[%s0] ss:$8 sm:%s2]
    %vm4 = vcmask 130048
    %5 = vst.msk [vmem:[#allocation0] ss:$8 sm:$0x3] %vm4, %v3
    %s6 = scalar_lea.vmem %s0, 7
    %s7 = smov 3
    %v8 = vld [vmem:[%s6] ss:$8 sm:%s7]
    %9 = vrot.lane.b32.xlu0 %v8, 112
    %v10 = vpop.permute.xlu0 %9
    %vm11 = vcmask 1048448
    %12 = vst.msk [vmem:[#allocation0] ss:$8 sm:$0x3] %vm11, %v10
    %s13 = scalar_lea.vmem %s0, 6
    %s14 = smov 3
    %v15 = vld [vmem:[%s13] ss:$8 sm:%s14]
    %16 = vrot.lane.b32.xlu0 %v15, 96
    %v17 = vpop.permute.xlu0 %16
    %vm18 = vcmask 917248
    %19 = vst.msk [vmem:[#allocation0] ss:$8 sm:$0x3] %vm18, %v17
    %s20 = scalar_lea.vmem %s0, 5
    %s21 = smov 3
    %v22 = vld [vmem:[%s20] ss:$8 sm:%s21]
    %23 = vrot.lane.b32.xlu0 %v22, 80
    %v24 = vpop.permute.xlu0 %23
    %vm25 = vcmask 786048
    %26 = vst.msk [vmem:[#allocation0] ss:$8 sm:$0x3] %vm25, %v24
    %s27 = scalar_lea.vmem %s0, 4
    %s28 = smov 3
    %v29 = vld [vmem:[%s27] ss:$8 sm:%s28]
    %30 = vrot.lane.b32.xlu0 %v29, 64
    %v31 = vpop.permute.xlu0 %30
    %vm32 = vcmask 654848
    %33 = vst.msk [vmem:[#allocation0] ss:$8 sm:$0x3] %vm32, %v31
    %s34 = scalar_lea.vmem %s0, 3
    %s35 = smov 3
    %v36 = vld [vmem:[%s34] ss:$8 sm:%s35]
    %37 = vrot.lane.b32.xlu0 %v36, 48
    %v38 = vpop.permute.xlu0 %37
    %vm39 = vcmask 523648
    %40 = vst.msk [vmem:[#allocation0] ss:$8 sm:$0x3] %vm39, %v38
    %s41 = scalar_lea.vmem %s0, 2
    %s42 = smov 3
    %v43 = vld [vmem:[%s41] ss:$8 sm:%s42]
    %44 = vrot.lane.b32.xlu0 %v43, 32
    %v45 = vpop.permute.xlu0 %44
    %vm46 = vcmask 392448
    %47 = vst.msk [vmem:[#allocation0] ss:$8 sm:$0x3] %vm46, %v45
    %s48 = scalar_lea.vmem %s0, 1
    %s49 = smov 3
    %v50 = vld [vmem:[%s48] ss:$8 sm:%s49]
    %51 = vrot.lane.b32.xlu0 %v50, 16
    %v52 = vpop.permute.xlu0 %51
    %vm53 = vcmask 261248
    %54 = vst.msk [vmem:[#allocation0] ss:$8 sm:$0x3] %vm53, %v52
    %s56 = sshll.u32 1, 1
    %s57 = ssub.s32 %s56, 1
    %v59 = vld [vmem:[#allocation0] sm:%s57]
    %s60 = sshll.u32 1, 1
    %s61 = ssub.s32 %s60, 1
    %62 = vst [vmem:[%s1] sm:%s61] %v59
    %s63 = scalar_lea.vmem [#allocation0], 8
    %v64 = vld [vmem:[%s63] sm:%s57]
    %s65 = sshll.u32 1, 1
    %s66 = ssub.s32 %s65, 1
    %s67 = scalar_lea.vmem %s1, 1
    %68 = vst [vmem:[%s67] sm:%s66] %v64

// kernel: tile.35
$region0: #{tile.35}
  %s0 = inlined_call_operand.vmem [shape: f32[16,4], index: 0, kind: input, shape index: {}]
  %s1 = inlined_call_operand.vmem [shape: f32[1,64], index: 1, kind: output, shape index: {}]
  $region1: #{tile.35} parent=0
    #allocation0 [shape = 'u8[4096]{0}', space=vmem, size = 0x1000, scoped, tag = 'scoped mem for output reshape']
    %v2 = vld [vmem:[%s0] sm:$0x1]
    %vm3 = vcmask 31744
    %4 = vst.msk [vmem:[#allocation0] sm:$0x1] %vm3, %v2
    %s5 = scalar_lea.vmem %s0, 15
    %v6 = vld [vmem:[%s5] sm:$0x1]
    %7 = vrot.lane.b32.xlu0 %v6, 60
    %v8 = vpop.permute.xlu0 %7
    %vm9 = vcmask 523744
    %10 = vst.msk [vmem:[#allocation0] sm:$0x1] %vm9, %v8
    %s11 = scalar_lea.vmem %s0, 14
    %v12 = vld [vmem:[%s11] sm:$0x1]
    %13 = vrot.lane.b32.xlu0 %v12, 56
    %v14 = vpop.permute.xlu0 %13
    %vm15 = vcmask 490944
    %16 = vst.msk [vmem:[#allocation0] sm:$0x1] %vm15, %v14
    %s17 = scalar_lea.vmem %s0, 13
    %v18 = vld [vmem:[%s17] sm:$0x1]
    %19 = vrot.lane.b32.xlu0 %v18, 52
    %v20 = vpop.permute.xlu0 %19
    %vm21 = vcmask 458144
    %22 = vst.msk [vmem:[#allocation0] sm:$0x1] %vm21, %v20
    %s23 = scalar_lea.vmem %s0, 12
    %v24 = vld [vmem:[%s23] sm:$0x1]
    %25 = vrot.lane.b32.xlu0 %v24, 48
    %v26 = vpop.permute.xlu0 %25
    %vm27 = vcmask 425344
    %28 = vst.msk [vmem:[#allocation0] sm:$0x1] %vm27, %v26
    %s29 = scalar_lea.vmem %s0, 11
    %v30 = vld [vmem:[%s29] sm:$0x1]
    %31 = vrot.lane.b32.xlu0 %v30, 44
    %v32 = vpop.permute.xlu0 %31
    %vm33 = vcmask 392544
    %34 = vst.msk [vmem:[#allocation0] sm:$0x1] %vm33, %v32
    %s35 = scalar_lea.vmem %s0, 10
    %v36 = vld [vmem:[%s35] sm:$0x1]
    %37 = vrot.lane.b32.xlu0 %v36, 40
    %v38 = vpop.permute.xlu0 %37
    %vm39 = vcmask 359744
    %40 = vst.msk [vmem:[#allocation0] sm:$0x1] %vm39, %v38
    %s41 = scalar_lea.vmem %s0, 9
    %v42 = vld [vmem:[%s41] sm:$0x1]
    %43 = vrot.lane.b32.xlu0 %v42, 36
    %v44 = vpop.permute.xlu0 %43
    %vm45 = vcmask 326944
    %46 = vst.msk [vmem:[#allocation0] sm:$0x1] %vm45, %v44
    %s47 = scalar_lea.vmem %s0, 8
    %v48 = vld [vmem:[%s47] sm:$0x1]
    %49 = vrot.lane.b32.xlu0 %v48, 32
    %v50 = vpop.permute.xlu0 %49
    %vm51 = vcmask 294144
    %52 = vst.msk [vmem:[#allocation0] sm:$0x1] %vm51, %v50
    %s53 = scalar_lea.vmem %s0, 7
    %v54 = vld [vmem:[%s53] sm:$0x1]
    %55 = vrot.lane.b32.xlu0 %v54, 28
    %v56 = vpop.permute.xlu0 %55
    %vm57 = vcmask 261344
    %58 = vst.msk [vmem:[#allocation0] sm:$0x1] %vm57, %v56
    %s59 = scalar_lea.vmem %s0, 6
    %v60 = vld [vmem:[%s59] sm:$0x1]
    %61 = vrot.lane.b32.xlu0 %v60, 24
    %v62 = vpop.permute.xlu0 %61
    %vm63 = vcmask 228544
    %64 = vst.msk [vmem:[#allocation0] sm:$0x1] %vm63, %v62
    %s65 = scalar_lea.vmem %s0, 5
    %v66 = vld [vmem:[%s65] sm:$0x1]
    %67 = vrot.lane.b32.xlu0 %v66, 20
    %v68 = vpop.permute.xlu0 %67
    %vm69 = vcmask 195744
    %70 = vst.msk [vmem:[#allocation0] sm:$0x1] %vm69, %v68
    %s71 = scalar_lea.vmem %s0, 4
    %v72 = vld [vmem:[%s71] sm:$0x1]
    %73 = vrot.lane.b32.xlu0 %v72, 16
    %v74 = vpop.permute.xlu0 %73
    %vm75 = vcmask 162944
    %76 = vst.msk [vmem:[#allocation0] sm:$0x1] %vm75, %v74
    %s77 = scalar_lea.vmem %s0, 3
    %v78 = vld [vmem:[%s77] sm:$0x1]
    %79 = vrot.lane.b32.xlu0 %v78, 12
    %v80 = vpop.permute.xlu0 %79
    %vm81 = vcmask 130144
    %82 = vst.msk [vmem:[#allocation0] sm:$0x1] %vm81, %v80
    %s83 = scalar_lea.vmem %s0, 2
    %v84 = vld [vmem:[%s83] sm:$0x1]
    %85 = vrot.lane.b32.xlu0 %v84, 8
    %v86 = vpop.permute.xlu0 %85
    %vm87 = vcmask 97344
    %88 = vst.msk [vmem:[#allocation0] sm:$0x1] %vm87, %v86
    %s89 = scalar_lea.vmem %s0, 1
    %v90 = vld [vmem:[%s89] sm:$0x1]
    %91 = vrot.lane.b32.xlu0 %v90, 4
    %v92 = vpop.permute.xlu0 %91
    %vm93 = vcmask 64544
    %94 = vst.msk [vmem:[#allocation0] sm:$0x1] %vm93, %v92
    %s96 = sshll.u32 1, 1
    %s97 = ssub.s32 %s96, 1
    %v99 = vld [vmem:[#allocation0] sm:%s97]
    %s100 = sshll.u32 1, 1
    %s101 = ssub.s32 %s100, 1
    %102 = vst [vmem:[%s1] sm:%s101] %v99

// kernel: bottleneck_forward.1
$region0: #{bottleneck_forward.1}
  #allocation0 [shape = 'u32[]', space=smem, size = 0x4, offset = 0x4, fixed_abs, tag = 'smem constant byte address 0x4 - core index']
  #allocation1 [shape = 'u32[144,128]{1,0:T(1,128)}', space=vmem, size = 0x12000, scoped, tag = 'internal scratch']
  #allocation2 [shape = 'f32[18,72]{1,0:T(8,128)}', space=vmem, size = 0x3000, scoped, tag = 'scratch operand']
  %s0 = inlined_call_operand.vmem [shape: f32[2,16,256], index: 0, kind: input, shape index: {}]
  %s1 = inlined_call_operand.vmem [shape: f32[256,72], index: 1, kind: input, shape index: {}]
  %s2 = inlined_call_operand.vmem [shape: f32[1,72], index: 2, kind: input, shape index: {}]
  %s3 = inlined_call_operand.vmem [shape: f32[1,72], index: 3, kind: input, shape index: {}]
  %s4 = inlined_call_operand.vmem [shape: f32[3,72,64], index: 4, kind: input, shape index: {}]
  %s5 = inlined_call_operand.vmem [shape: f32[1,64], index: 5, kind: input, shape index: {}]
  %s6 = inlined_call_operand.vmem [shape: f32[1,64], index: 6, kind: input, shape index: {}]
  %s7 = inlined_call_operand.vmem [shape: f32[64,256], index: 7, kind: input, shape index: {}]
  %s8 = inlined_call_operand.vmem [shape: f32[1,256], index: 8, kind: input, shape index: {}]
  %s9 = inlined_call_operand.vmem [shape: f32[1,256], index: 9, kind: input, shape index: {}]
  %s10 = inlined_call_operand.vmem [shape: f32[2,16,256], index: 10, kind: output, shape index: {}]
  %s11 = sld [smem:[#allocation0]]
  $region73: #{bottleneck_forward.1} parent=0
    _
  %s13 = ssub.s32 1, %s11
  %s14 = scalar_select 0, %s13, %s11
  loop: start=0, step=1, limit=4
  $region2: #{bottleneck_forward.1} parent=0 // loop_pre_header
    _
  $region3: #{bottleneck_forward.1} parent=0 // loop_header
    %s16 = sphi 0, %s20
    %p17 = scmp.ge.s32.totalorder %s16, 4
    %s26 = sphi 0, %s28
    %s29 = sphi 0, %s26
    %s30 = sphi 0, %s29
    %s46 = sphi 0, %s30
    %s50 = sphi 0, %s50
    %s52 = sphi 0, %s50
    %s53 = sphi 0, %s52
    %s67 = sphi 0, %s53
    %s71 = sphi 0, %s71
    %s73 = sphi 0, %s71
    %s74 = sphi 0, %s73
    %s88 = sphi 0, %s74
    %s92 = sphi 0, %s92
    %s94 = sphi 0, %s92
    %s95 = sphi 0, %s94
    %s109 = sphi 0, %s95
    %s113 = sphi 0, %s113
    %s115 = sphi 0, %s113
    %s116 = sphi 0, %s115
    %s130 = sphi 0, %s116
    %s134 = sphi 0, %s134
    %s136 = sphi 0, %s134
    %s137 = sphi 0, %s136
    %s151 = sphi 0, %s137
    %s155 = sphi 0, %s155
    %s157 = sphi 0, %s155
    %s158 = sphi 0, %s157
    %s172 = sphi 0, %s158
    %s176 = sphi 0, %s176
    %s178 = sphi 0, %s176
    %s179 = sphi 0, %s178
    %s193 = sphi 0, %s179
    %s197 = sphi 0, %s197
    %s199 = sphi 0, %s197
    %s200 = sphi 0, %s199
    %s214 = sphi 0, %s200
    %s218 = sphi 0, %s218
    %s220 = sphi 0, %s218
    %s221 = sphi 0, %s220
    %s235 = sphi 0, %s221
    %s241 = sphi 0, %s243
    %s244 = sphi 0, %s241
    %s245 = sphi 0, %s244
    %s261 = sphi 0, %s245
  $region4: #{bottleneck_forward.1} parent=0 // loop_header_branch
    %19 = sbr.rel (%p17) target = $region8
  $region5: #{bottleneck_forward.1} parent=0 // loop_body
    %s21 = ssub.s32 %s16, 1
    %s22 = ssub.s32 %s16, 2
    %s23 = sadd.s32 %s16, 1
    %s24 = ssub.s32 %s16, %s23
    %p25 = scmp.eq.s32.totalorder %s24, 0
    %s27 = sadd.s32 %s26, 1
    %s28 = scalar_select %p25, %s26, %s27
    %p31 = pneg %p25
    %p32 = scmp.eq.s32.totalorder %s16, 1
    %p33 = por %p31, %p32
    %p34 = scmp.ne.s32.totalorder %s26, %s29
    %p35 = scmp.eq.s32.totalorder %s16, 0
    %p36 = por %p34, %p35
    %p37 = scmp.ne.s32.totalorder %s26, %s29
    %p38 = scmp.eq.s32.totalorder %s21, 1
    %p39 = por %p37, %p38
    %p40 = scmp.ne.s32.totalorder %s29, %s30
    %p41 = scmp.eq.s32.totalorder %s21, 0
    %p42 = por %p40, %p41
    %p43 = scmp.ne.s32.totalorder %s29, %s30
    %p44 = scmp.eq.s32.totalorder %s22, 1
    %p45 = por %p43, %p44
    %p47 = scmp.ne.s32.totalorder %s30, %s46
    %p48 = scmp.eq.s32.totalorder %s22, 0
    %p49 = por %p47, %p48
    %s51 = sadd.s32 %s50, 1
    %p54 = scmp.eq.s32.totalorder %s16, 1
    %p55 = scmp.ne.s32.totalorder %s50, %s52
    %p56 = scmp.eq.s32.totalorder %s16, 0
    %p57 = por %p55, %p56
    %p58 = scmp.ne.s32.totalorder %s50, %s52
    %p59 = scmp.eq.s32.totalorder %s21, 1
    %p60 = por %p58, %p59
    %p61 = scmp.ne.s32.totalorder %s52, %s53
    %p62 = scmp.eq.s32.totalorder %s21, 0
    %p63 = por %p61, %p62
    %p64 = scmp.ne.s32.totalorder %s52, %s53
    %p65 = scmp.eq.s32.totalorder %s22, 1
    %p66 = por %p64, %p65
    %p68 = scmp.ne.s32.totalorder %s53, %s67
    %p69 = scmp.eq.s32.totalorder %s22, 0
    %p70 = por %p68, %p69
    %s72 = sadd.s32 %s71, 1
    %p75 = scmp.eq.s32.totalorder %s16, 1
    %p76 = scmp.ne.s32.totalorder %s71, %s73
    %p77 = scmp.eq.s32.totalorder %s16, 0
    %p78 = por %p76, %p77
    %p79 = scmp.ne.s32.totalorder %s71, %s73
    %p80 = scmp.eq.s32.totalorder %s21, 1
    %p81 = por %p79, %p80
    %p82 = scmp.ne.s32.totalorder %s73, %s74
    %p83 = scmp.eq.s32.totalorder %s21, 0
    %p84 = por %p82, %p83
    %p85 = scmp.ne.s32.totalorder %s73, %s74
    %p86 = scmp.eq.s32.totalorder %s22, 1
    %p87 = por %p85, %p86
    %p89 = scmp.ne.s32.totalorder %s74, %s88
    %p90 = scmp.eq.s32.totalorder %s22, 0
    %p91 = por %p89, %p90
    %s93 = sadd.s32 %s92, 1
    %p96 = scmp.eq.s32.totalorder %s16, 1
    %p97 = scmp.ne.s32.totalorder %s92, %s94
    %p98 = scmp.eq.s32.totalorder %s16, 0
    %p99 = por %p97, %p98
    %p100 = scmp.ne.s32.totalorder %s92, %s94
    %p101 = scmp.eq.s32.totalorder %s21, 1
    %p102 = por %p100, %p101
    %p103 = scmp.ne.s32.totalorder %s94, %s95
    %p104 = scmp.eq.s32.totalorder %s21, 0
    %p105 = por %p103, %p104
    %p106 = scmp.ne.s32.totalorder %s94, %s95
    %p107 = scmp.eq.s32.totalorder %s22, 1
    %p108 = por %p106, %p107
    %p110 = scmp.ne.s32.totalorder %s95, %s109
    %p111 = scmp.eq.s32.totalorder %s22, 0
    %p112 = por %p110, %p111
    %s114 = sadd.s32 %s113, 1
    %p117 = scmp.eq.s32.totalorder %s16, 1
    %p118 = scmp.ne.s32.totalorder %s113, %s115
    %p119 = scmp.eq.s32.totalorder %s16, 0
    %p120 = por %p118, %p119
    %p121 = scmp.ne.s32.totalorder %s113, %s115
    %p122 = scmp.eq.s32.totalorder %s21, 1
    %p123 = por %p121, %p122
    %p124 = scmp.ne.s32.totalorder %s115, %s116
    %p125 = scmp.eq.s32.totalorder %s21, 0
    %p126 = por %p124, %p125
    %p127 = scmp.ne.s32.totalorder %s115, %s116
    %p128 = scmp.eq.s32.totalorder %s22, 1
    %p129 = por %p127, %p128
    %p131 = scmp.ne.s32.totalorder %s116, %s130
    %p132 = scmp.eq.s32.totalorder %s22, 0
    %p133 = por %p131, %p132
    %s135 = sadd.s32 %s134, 1
    %p138 = scmp.eq.s32.totalorder %s16, 1
    %p139 = scmp.ne.s32.totalorder %s134, %s136
    %p140 = scmp.eq.s32.totalorder %s16, 0
    %p141 = por %p139, %p140
    %p142 = scmp.ne.s32.totalorder %s134, %s136
    %p143 = scmp.eq.s32.totalorder %s21, 1
    %p144 = por %p142, %p143
    %p145 = scmp.ne.s32.totalorder %s136, %s137
    %p146 = scmp.eq.s32.totalorder %s21, 0
    %p147 = por %p145, %p146
    %p148 = scmp.ne.s32.totalorder %s136, %s137
    %p149 = scmp.eq.s32.totalorder %s22, 1
    %p150 = por %p148, %p149
    %p152 = scmp.ne.s32.totalorder %s137, %s151
    %p153 = scmp.eq.s32.totalorder %s22, 0
    %p154 = por %p152, %p153
    %s156 = sadd.s32 %s155, 1
    %p159 = scmp.eq.s32.totalorder %s16, 1
    %p160 = scmp.ne.s32.totalorder %s155, %s157
    %p161 = scmp.eq.s32.totalorder %s16, 0
    %p162 = por %p160, %p161
    %p163 = scmp.ne.s32.totalorder %s155, %s157
    %p164 = scmp.eq.s32.totalorder %s21, 1
    %p165 = por %p163, %p164
    %p166 = scmp.ne.s32.totalorder %s157, %s158
    %p167 = scmp.eq.s32.totalorder %s21, 0
    %p168 = por %p166, %p167
    %p169 = scmp.ne.s32.totalorder %s157, %s158
    %p170 = scmp.eq.s32.totalorder %s22, 1
    %p171 = por %p169, %p170
    %p173 = scmp.ne.s32.totalorder %s158, %s172
    %p174 = scmp.eq.s32.totalorder %s22, 0
    %p175 = por %p173, %p174
    %s177 = sadd.s32 %s176, 1
    %p180 = scmp.eq.s32.totalorder %s16, 1
    %p181 = scmp.ne.s32.totalorder %s176, %s178
    %p182 = scmp.eq.s32.totalorder %s16, 0
    %p183 = por %p181, %p182
    %p184 = scmp.ne.s32.totalorder %s176, %s178
    %p185 = scmp.eq.s32.totalorder %s21, 1
    %p186 = por %p184, %p185
    %p187 = scmp.ne.s32.totalorder %s178, %s179
    %p188 = scmp.eq.s32.totalorder %s21, 0
    %p189 = por %p187, %p188
    %p190 = scmp.ne.s32.totalorder %s178, %s179
    %p191 = scmp.eq.s32.totalorder %s22, 1
    %p192 = por %p190, %p191
    %p194 = scmp.ne.s32.totalorder %s179, %s193
    %p195 = scmp.eq.s32.totalorder %s22, 0
    %p196 = por %p194, %p195
    %s198 = sadd.s32 %s197, 1
    %p201 = scmp.eq.s32.totalorder %s16, 1
    %p202 = scmp.ne.s32.totalorder %s197, %s199
    %p203 = scmp.eq.s32.totalorder %s16, 0
    %p204 = por %p202, %p203
    %p205 = scmp.ne.s32.totalorder %s197, %s199
    %p206 = scmp.eq.s32.totalorder %s21, 1
    %p207 = por %p205, %p206
    %p208 = scmp.ne.s32.totalorder %s199, %s200
    %p209 = scmp.eq.s32.totalorder %s21, 0
    %p210 = por %p208, %p209
    %p211 = scmp.ne.s32.totalorder %s199, %s200
    %p212 = scmp.eq.s32.totalorder %s22, 1
    %p213 = por %p211, %p212
    %p215 = scmp.ne.s32.totalorder %s200, %s214
    %p216 = scmp.eq.s32.totalorder %s22, 0
    %p217 = por %p215, %p216
    %s219 = sadd.s32 %s218, 1
    %p222 = scmp.eq.s32.totalorder %s16, 1
    %p223 = scmp.ne.s32.totalorder %s218, %s220
    %p224 = scmp.eq.s32.totalorder %s16, 0
    %p225 = por %p223, %p224
    %p226 = scmp.ne.s32.totalorder %s218, %s220
    %p227 = scmp.eq.s32.totalorder %s21, 1
    %p228 = por %p226, %p227
    %p229 = scmp.ne.s32.totalorder %s220, %s221
    %p230 = scmp.eq.s32.totalorder %s21, 0
    %p231 = por %p229, %p230
    %p232 = scmp.ne.s32.totalorder %s220, %s221
    %p233 = scmp.eq.s32.totalorder %s22, 1
    %p234 = por %p232, %p233
    %p236 = scmp.ne.s32.totalorder %s221, %s235
    %p237 = scmp.eq.s32.totalorder %s22, 0
    %p238 = por %p236, %p237
    %s239 = ssub.s32 %s16, %s23
    %p240 = scmp.eq.s32.totalorder %s239, 0
    %s242 = sadd.s32 %s241, 1
    %s243 = scalar_select %p240, %s241, %s242
    %p246 = pneg %p240
    %p247 = scmp.eq.s32.totalorder %s16, 1
    %p248 = por %p246, %p247
    %p249 = scmp.ne.s32.totalorder %s241, %s244
    %p250 = scmp.eq.s32.totalorder %s16, 0
    %p251 = por %p249, %p250
    %p252 = scmp.ne.s32.totalorder %s241, %s244
    %p253 = scmp.eq.s32.totalorder %s21, 1
    %p254 = por %p252, %p253
    %p255 = scmp.ne.s32.totalorder %s244, %s245
    %p256 = scmp.eq.s32.totalorder %s21, 0
    %p257 = por %p255, %p256
    %p258 = scmp.ne.s32.totalorder %s244, %s245
    %p259 = scmp.eq.s32.totalorder %s22, 1
    %p260 = por %p258, %p259
    %p262 = scmp.ne.s32.totalorder %s245, %s261
    %p263 = scmp.eq.s32.totalorder %s22, 0
    %p264 = por %p262, %p263
    %p265 = scmp.le.s32.totalorder 1, %s16
    %p266 = scmp.lt.s32.totalorder %s16, 3
    %p267 = pnand %p265, %p266
    %p268 = pneg %p267
    // Predicated region
    $region9: #{bottleneck_forward.1} parent=5 // pred_check
      _
    $region10: #{bottleneck_forward.1} parent=5 // pred_check_branch
      %270 = sbr.rel (%p267) target = $region12
    $region11: #{bottleneck_forward.1} parent=5 // pred_region
      %s271 = ssub.s32 %s16, 1
      // Predicated region
      $region13: #{bottleneck_forward.1} parent=11 // pred_check
        %p272 = pneg %p63
      $region14: #{bottleneck_forward.1} parent=11 // pred_check_branch
        %274 = sbr.rel (%p272) target = $region16
      $region15: #{bottleneck_forward.1} parent=11 // pred_region
        _
      $region16: #{bottleneck_forward.1} parent=11 // pred_fallthru
        _
      // Predicated region
      $region17: #{bottleneck_forward.1} parent=11 // pred_check
        %p275 = pneg %p84
      $region18: #{bottleneck_forward.1} parent=11 // pred_check_branch
        %277 = sbr.rel (%p275) target = $region20
      $region19: #{bottleneck_forward.1} parent=11 // pred_region
        _
      $region20: #{bottleneck_forward.1} parent=11 // pred_fallthru
        _
      // Predicated region
      $region21: #{bottleneck_forward.1} parent=11 // pred_check
        %p278 = pneg %p105
      $region22: #{bottleneck_forward.1} parent=11 // pred_check_branch
        %280 = sbr.rel (%p278) target = $region24
      $region23: #{bottleneck_forward.1} parent=11 // pred_region
        _
      $region24: #{bottleneck_forward.1} parent=11 // pred_fallthru
        _
      // Predicated region
      $region25: #{bottleneck_forward.1} parent=11 // pred_check
        %p281 = pneg %p126
      $region26: #{bottleneck_forward.1} parent=11 // pred_check_branch
        %283 = sbr.rel (%p281) target = $region28
      $region27: #{bottleneck_forward.1} parent=11 // pred_region
        _
      $region28: #{bottleneck_forward.1} parent=11 // pred_fallthru
        _
      // Predicated region
      $region29: #{bottleneck_forward.1} parent=11 // pred_check
        %p284 = pneg %p147
      $region30: #{bottleneck_forward.1} parent=11 // pred_check_branch
        %286 = sbr.rel (%p284) target = $region32
      $region31: #{bottleneck_forward.1} parent=11 // pred_region
        _
      $region32: #{bottleneck_forward.1} parent=11 // pred_fallthru
        _
      // Predicated region
      $region33: #{bottleneck_forward.1} parent=11 // pred_check
        %p287 = pneg %p168
      $region34: #{bottleneck_forward.1} parent=11 // pred_check_branch
        %289 = sbr.rel (%p287) target = $region36
      $region35: #{bottleneck_forward.1} parent=11 // pred_region
        _
      $region36: #{bottleneck_forward.1} parent=11 // pred_fallthru
        _
      // Predicated region
      $region37: #{bottleneck_forward.1} parent=11 // pred_check
        %p290 = pneg %p189
      $region38: #{bottleneck_forward.1} parent=11 // pred_check_branch
        %292 = sbr.rel (%p290) target = $region40
      $region39: #{bottleneck_forward.1} parent=11 // pred_region
        _
      $region40: #{bottleneck_forward.1} parent=11 // pred_fallthru
        _
      // Predicated region
      $region41: #{bottleneck_forward.1} parent=11 // pred_check
        %p293 = pneg %p210
      $region42: #{bottleneck_forward.1} parent=11 // pred_check_branch
        %295 = sbr.rel (%p293) target = $region44
      $region43: #{bottleneck_forward.1} parent=11 // pred_region
        _
      $region44: #{bottleneck_forward.1} parent=11 // pred_fallthru
        _
      // Predicated region
      $region45: #{bottleneck_forward.1} parent=11 // pred_check
        %p296 = pneg %p231
      $region46: #{bottleneck_forward.1} parent=11 // pred_check_branch
        %298 = sbr.rel (%p296) target = $region48
      $region47: #{bottleneck_forward.1} parent=11 // pred_region
        _
      $region48: #{bottleneck_forward.1} parent=11 // pred_fallthru
        _
    $region12: #{bottleneck_forward.1} parent=5 // pred_fallthru
      _
    %p299 = scmp.lt.s32.totalorder %s16, 2
    // Predicated region
    $region49: #{bottleneck_forward.1} parent=5 // pred_check
      %p300 = pneg %p299
    $region50: #{bottleneck_forward.1} parent=5 // pred_check_branch
      %302 = sbr.rel (%p300) target = $region52
    $region51: #{bottleneck_forward.1} parent=5 // pred_region
      // Predicated region
      $region53: #{bottleneck_forward.1} parent=51 // pred_check
        %p303 = pneg %p36
      $region54: #{bottleneck_forward.1} parent=51 // pred_check_branch
        %305 = sbr.rel (%p303) target = $region56
      $region55: #{bottleneck_forward.1} parent=51 // pred_region
        %p306 = scmp.lt.s32.totalorder %s16, 1
        %s307 = scalar_select %p306, %s16, 1
        %s308 = smul.addr %s307, 4
        %s309 = smul.addr %s308, 8
        %s310 = scalar_lea.vmem %s0, %s309
      $region56: #{bottleneck_forward.1} parent=51 // pred_fallthru
        _
    $region52: #{bottleneck_forward.1} parent=5 // pred_fallthru
      _
    %p311 = scmp.le.s32.totalorder 1, %s16
    %p312 = scmp.lt.s32.totalorder %s16, 3
    %p313 = pnand %p311, %p312
    %p314 = pneg %p313
    // Predicated region
    $region57: #{bottleneck_forward.1} parent=5 // pred_check
      _
    $region58: #{bottleneck_forward.1} parent=5 // pred_check_branch
      %316 = sbr.rel (%p313) target = $region60
    $region59: #{bottleneck_forward.1} parent=5 // pred_region
      %s317 = ssub.s32 %s16, 1
      %p318 = scmp.lt.s32.totalorder %s21, 1
      %s319 = scalar_select %p318, %s21, 1
      %s320 = smul.addr %s319, 4
      %s321 = smul.addr %s320, 8
      %s322 = scalar_lea.vmem %s0, %s321
      %p323 = pneg %p42
      %p324 = pneg %p39
      %p325 = pneg %p63
      %p326 = pneg %p60
      %p327 = pneg %p84
      %p328 = pneg %p81
      %p329 = pneg %p105
      %p330 = pneg %p102
      %p331 = pneg %p126
      %p332 = pneg %p123
      %p333 = pneg %p147
      %p334 = pneg %p144
      %p335 = pneg %p168
      %p336 = pneg %p165
      %p337 = pneg %p189
      %p338 = pneg %p186
      %p339 = pneg %p210
      %p340 = pneg %p207
      %p341 = pneg %p231
      %p342 = pneg %p228
      %p343 = pneg %p257
      %p344 = pneg %p254
      %p345 = scmp.lt.s32.totalorder %s21, 1
      %s346 = scalar_select %p345, %s21, 1
      %s347 = smul.addr %s346, 4
      %s348 = smul.addr %s347, 8
      %s349 = scalar_lea.vmem %s10, %s348
      %p350 = scmp.lt.s32.totalorder %s21, 1
      %s351 = scalar_select %p350, %s21, 1
      %s352 = smul.addr %s351, 4
      %s353 = smul.addr %s352, 8
      %s354 = scalar_lea.vmem %s0, %s353
      %p355 = scmp.lt.s32.totalorder %s21, 1
      %s356 = scalar_select %p355, %s21, 1
      %s357 = smul.addr %s356, 4
      %s358 = smul.addr %s357, 8
      %s359 = scalar_lea.vmem %s10, %s358
      %v360 = vld [vmem:[%s354] sm:$0xff]
      %v361 = vld [vmem:[%s354 + $0x8] sm:$0xff]
      %v362 = vld [vmem:[%s354 + $0x10] sm:$0xff]
      %v363 = vld [vmem:[%s354 + $0x18] sm:$0xff]
      %v364 = vld [vmem:[%s1] sm:$0xff]
      %v365 = vld [vmem:[%s1 + $0x8] sm:$0xff]
      %v366 = vld [vmem:[%s1 + $0x10] sm:$0xff]
      %v367 = vld [vmem:[%s1 + $0x18] sm:$0xff]
      %v368 = vld [vmem:[%s1 + $0x20] sm:$0xff]
      %v369 = vld [vmem:[%s1 + $0x28] sm:$0xff]
      %v370 = vld [vmem:[%s1 + $0x30] sm:$0xff]
      %v371 = vld [vmem:[%s1 + $0x38] sm:$0xff]
      %v372 = vld [vmem:[%s1 + $0x40] sm:$0xff]
      %v373 = vld [vmem:[%s1 + $0x48] sm:$0xff]
      %v374 = vld [vmem:[%s1 + $0x50] sm:$0xff]
      %v375 = vld [vmem:[%s1 + $0x58] sm:$0xff]
      %v376 = vld [vmem:[%s1 + $0x60] sm:$0xff]
      %v377 = vld [vmem:[%s1 + $0x68] sm:$0xff]
      %v378 = vld [vmem:[%s1 + $0x70] sm:$0xff]
      %v379 = vld [vmem:[%s1 + $0x78] sm:$0xff]
      %v380 = vld [vmem:[%s1 + $0x80] sm:$0xff]
      %v381 = vld [vmem:[%s1 + $0x88] sm:$0xff]
      %v382 = vld [vmem:[%s1 + $0x90] sm:$0xff]
      %v383 = vld [vmem:[%s1 + $0x98] sm:$0xff]
      %v384 = vld [vmem:[%s1 + $0xa0] sm:$0xff]
      %v385 = vld [vmem:[%s1 + $0xa8] sm:$0xff]
      %v386 = vld [vmem:[%s1 + $0xb0] sm:$0xff]
      %v387 = vld [vmem:[%s1 + $0xb8] sm:$0xff]
      %v388 = vld [vmem:[%s1 + $0xc0] sm:$0xff]
      %v389 = vld [vmem:[%s1 + $0xc8] sm:$0xff]
      %v390 = vld [vmem:[%s1 + $0xd0] sm:$0xff]
      %v391 = vld [vmem:[%s1 + $0xd8] sm:$0xff]
      %v392 = vld [vmem:[%s1 + $0xe0] sm:$0xff]
      %v393 = vld [vmem:[%s1 + $0xe8] sm:$0xff]
      %v394 = vld [vmem:[%s1 + $0xf0] sm:$0xff]
      %v395 = vld [vmem:[%s1 + $0xf8] sm:$0xff]
      %396 = vmatprep.subr.mxu0 0.0
      %397 = vmatpush1.msra.mxu0 %v379
      %398 = vmatprep.subr.mxu0 0.0
      %399 = vmatpush1.msra.mxu0 %v378
      %400 = vmatprep.subr.mxu0 0.0
      %401 = vmatpush1.msra.mxu0 %v377
      %402 = vmatprep.subr.mxu0 0.0
      %403 = vmatpush1.msra.mxu0 %v376
      %404 = vmatprep.subr.mxu0 0.0
      %405 = vmatpush1.msra.mxu0 %v375
      %406 = vmatprep.subr.mxu0 0.0
      %407 = vmatpush1.msra.mxu0 %v374
      %408 = vmatprep.subr.mxu0 0.0
      %409 = vmatpush1.msra.mxu0 %v373
      %410 = vmatprep.subr.mxu0 0.0
      %411 = vmatpush1.msra.mxu0 %v372
      %412 = vmatprep.subr.mxu0 0.0
      %413 = vmatpush1.msra.mxu0 %v371
      %414 = vmatprep.subr.mxu0 0.0
      %415 = vmatpush1.msra.mxu0 %v370
      %416 = vmatprep.subr.mxu0 0.0
      %417 = vmatpush1.msra.mxu0 %v369
      %418 = vmatprep.subr.mxu0 0.0
      %419 = vmatpush1.msra.mxu0 %v368
      %420 = vmatprep.subr.mxu0 0.0
      %421 = vmatpush1.msra.mxu0 %v367
      %422 = vmatprep.subr.mxu0 0.0
      %423 = vmatpush1.msra.mxu0 %v366
      %424 = vmatprep.subr.mxu0 0.0
      %425 = vmatpush1.msra.mxu0 %v365
      %426 = vmatprep.subr.mxu0 0.0
      %427 = vmatpush1.msra.mxu0 %v364
      %428 = vmatprep.subr.mxu0 0.0
      %429 = vmatpush2.msra.mxu0 %v395
      %430 = vmatprep.subr.mxu0 0.0
      %431 = vmatpush2.msra.mxu0 %v394
      %432 = vmatprep.subr.mxu0 0.0
      %433 = vmatpush2.msra.mxu0 %v393
      %434 = vmatprep.subr.mxu0 0.0
      %435 = vmatpush2.msra.mxu0 %v392
      %436 = vmatprep.subr.mxu0 0.0
      %437 = vmatpush2.msra.mxu0 %v391
      %438 = vmatprep.subr.mxu0 0.0
      %439 = vmatpush2.msra.mxu0 %v390
      %440 = vmatprep.subr.mxu0 0.0
      %441 = vmatpush2.msra.mxu0 %v389
      %442 = vmatprep.subr.mxu0 0.0
      %443 = vmatpush2.msra.mxu0 %v388
      %444 = vmatprep.subr.mxu0 0.0
      %445 = vmatpush2.msra.mxu0 %v387
      %446 = vmatprep.subr.mxu0 0.0
      %447 = vmatpush2.msra.mxu0 %v386
      %448 = vmatprep.subr.mxu0 0.0
      %449 = vmatpush2.msra.mxu0 %v385
      %450 = vmatprep.subr.mxu0 0.0
      %451 = vmatpush2.msra.mxu0 %v384
      %452 = vmatprep.subr.mxu0 0.0
      %453 = vmatpush2.msra.mxu0 %v383
      %454 = vmatprep.subr.mxu0 0.0
      %455 = vmatpush2.msra.mxu0 %v382
      %456 = vmatprep.subr.mxu0 0.0
      %457 = vmatpush2.msra.mxu0 %v381
      %458 = vmatprep.subr.mxu0 0.0
      %459 = vmatpush2.msra.mxu0 %v380
      %460 = vmatprep.mubr.f32.mxu0 %v361
      %461 = vmatmul.mubr.f32.gmra.mxu0 %v360
      %v462 = vpop.f32.mrf.mxu0
      %v463 = vadd.f32 0.0, %v462
      %v464 = vpop.f32.mrf.mxu0
      %465 = vmatprep.mubr.f32.mxu0 %v363
      %466 = vmatmul.mubr.f32.gmra.mxu0 %v362
      %v467 = vpop.f32.mrf.mxu0
      %v468 = vadd.f32 0.0, %v467
      %v469 = vpop.f32.mrf.mxu0
      %470 = vdwg.mxu0
      %v471 = vld [vmem:[%s2] sm:$0x1]
      %v473 = vlaneseq
      %v474 = vshrl.u32 %v473, 7
      %v475 = vsub.s32 0, %v474
      %v476 = vrot.slane %v471, %v475
      %v478 = vmul.f32 %v463, %v476
      %v479 = vmul.f32 %v468, %v476
      %v480 = vld [vmem:[%s3] sm:$0x1]
      %v482 = vlaneseq
      %v483 = vshrl.u32 %v482, 7
      %v484 = vsub.s32 0, %v483
      %v485 = vrot.slane %v480, %v484
      %v487 = vadd.f32 %v478, %v485
      %v488 = vadd.f32 %v479, %v485
      %v489 = vmax.f32 %v487, 0.0
      %v490 = vmax.f32 %v488, 0.0
      %vm491 = vcmask 581632
      %492 = vst.msk [vmem:[#allocation2] sm:$0x1] %vm491, 0.0
      %493 = vst.msk [vmem:[#allocation2 + $0x11] sm:$0x1] %vm491, 0.0
      %vm494 = vcmask 588800
      %495 = vst.msk [vmem:[#allocation2 + $0x1] sm:$0xff] %vm494, %v489
      %496 = vst.msk [vmem:[#allocation2 + $0x9] sm:$0xff] %vm494, %v490
      %v497 = vld [vmem:[#allocation2] sm:$0xff]
      %v498 = vld [vmem:[#allocation2 + $0x8] sm:$0xff]
      %v499 = vld [vmem:[%s4] sm:$0xff]
      %v500 = vld [vmem:[%s4 + $0x8] sm:$0xff]
      %v501 = vld [vmem:[%s4 + $0x10] sm:$0xff]
      %v502 = vld [vmem:[%s4 + $0x18] sm:$0xff]
      %v503 = vld [vmem:[%s4 + $0x20] sm:$0xff]
      %v504 = vld [vmem:[%s4 + $0x28] sm:$0xff]
      %v505 = vld [vmem:[%s4 + $0x30] sm:$0xff]
      %v506 = vld [vmem:[%s4 + $0x38] sm:$0xff]
      %v507 = vld [vmem:[%s4 + $0x40] sm:$0xff]
      %v508 = vld [vmem:[#allocation2 + $0x1] sm:$0xff]
      %v509 = vld [vmem:[#allocation2 + $0x9] sm:$0xff]
      %s510 = scalar_lea.vmem %s4, 72
      %v511 = vld [vmem:[%s510] sm:$0xff]
      %v512 = vld [vmem:[%s510 + $0x8] sm:$0xff]
      %v513 = vld [vmem:[%s510 + $0x10] sm:$0xff]
      %v514 = vld [vmem:[%s510 + $0x18] sm:$0xff]
      %v515 = vld [vmem:[%s510 + $0x20] sm:$0xff]
      %v516 = vld [vmem:[%s510 + $0x28] sm:$0xff]
      %v517 = vld [vmem:[%s510 + $0x30] sm:$0xff]
      %v518 = vld [vmem:[%s510 + $0x38] sm:$0xff]
      %v519 = vld [vmem:[%s510 + $0x40] sm:$0xff]
      %v521 = vsel %vm494, %v508, 0
      %v524 = vsel %vm494, %v509, 0
      %526 = vmatprep.subr.mxu0 0.0
      %527 = vmatpush1.msra.mxu0 0.0
      %528 = vmatprep.subr.mxu0 0.0
      %529 = vmatpush1.msra.mxu0 0.0
      %530 = vmatprep.subr.mxu0 0.0
      %531 = vmatpush1.msra.mxu0 0.0
      %532 = vmatprep.subr.mxu0 0.0
      %533 = vmatpush1.msra.mxu0 0.0
      %534 = vmatprep.subr.mxu0 0.0
      %535 = vmatpush1.msra.mxu0 0.0
      %536 = vmatprep.subr.mxu0 0.0
      %537 = vmatpush1.msra.mxu0 0.0
      %538 = vmatprep.subr.mxu0 0.0
      %539 = vmatpush1.msra.mxu0 0.0
      %540 = vmatprep.subr.mxu0 0.0
      %541 = vmatpush1.msra.mxu0 %v519
      %542 = vmatprep.subr.mxu0 0.0
      %543 = vmatpush1.msra.mxu0 %v518
      %544 = vmatprep.subr.mxu0 0.0
      %545 = vmatpush1.msra.mxu0 %v517
      %546 = vmatprep.subr.mxu0 0.0
      %547 = vmatpush1.msra.mxu0 %v516
      %548 = vmatprep.subr.mxu0 0.0
      %549 = vmatpush1.msra.mxu0 %v515
      %550 = vmatprep.subr.mxu0 0.0
      %551 = vmatpush1.msra.mxu0 %v514
      %552 = vmatprep.subr.mxu0 0.0
      %553 = vmatpush1.msra.mxu0 %v513
      %554 = vmatprep.subr.mxu0 0.0
      %555 = vmatpush1.msra.mxu0 %v512
      %556 = vmatprep.subr.mxu0 0.0
      %557 = vmatpush1.msra.mxu0 %v511
      %558 = vmatprep.subr.mxu0 0.0
      %559 = vmatpush2.msra.mxu0 0.0
      %560 = vmatprep.subr.mxu0 0.0
      %561 = vmatpush2.msra.mxu0 0.0
      %562 = vmatprep.subr.mxu0 0.0
      %563 = vmatpush2.msra.mxu0 0.0
      %564 = vmatprep.subr.mxu0 0.0
      %565 = vmatpush2.msra.mxu0 0.0
      %566 = vmatprep.subr.mxu0 0.0
      %567 = vmatpush2.msra.mxu0 0.0
      %568 = vmatprep.subr.mxu0 0.0
      %569 = vmatpush2.msra.mxu0 0.0
      %570 = vmatprep.subr.mxu0 0.0
      %571 = vmatpush2.msra.mxu0 0.0
      %572 = vmatprep.subr.mxu0 0.0
      %573 = vmatpush2.msra.mxu0 0.0
      %574 = vmatprep.subr.mxu0 0.0
      %575 = vmatpush2.msra.mxu0 0.0
      %576 = vmatprep.subr.mxu0 0.0
      %577 = vmatpush2.msra.mxu0 0.0
      %578 = vmatprep.subr.mxu0 0.0
      %579 = vmatpush2.msra.mxu0 0.0
      %580 = vmatprep.subr.mxu0 0.0
      %581 = vmatpush2.msra.mxu0 0.0
      %582 = vmatprep.subr.mxu0 0.0
      %583 = vmatpush2.msra.mxu0 0.0
      %584 = vmatprep.subr.mxu0 0.0
      %585 = vmatpush2.msra.mxu0 0.0
      %586 = vmatprep.subr.mxu0 0.0
      %587 = vmatpush2.msra.mxu0 0.0
      %588 = vmatprep.subr.mxu0 0.0
      %589 = vmatpush2.msra.mxu0 0.0
      %590 = vmatprep.mubr.f32.mxu0 0.0
      %591 = vmatmul.mubr.f32.gmra.mxu0 %v521
      %v592 = vpop.f32.mrf.mxu0
      %v593 = vadd.f32 0.0, %v592
      %v594 = vpop.f32.mrf.mxu0
      %595 = vmatprep.mubr.f32.mxu0 0.0
      %596 = vmatmul.mubr.f32.gmra.mxu0 %v524
      %v597 = vpop.f32.mrf.mxu0
      %v598 = vadd.f32 0.0, %v597
      %v599 = vpop.f32.mrf.mxu0
      %600 = vdwg.mxu0
      %v602 = vsel %vm494, %v497, 0
      %v605 = vsel %vm494, %v498, 0
      %607 = vmatprep.subr.mxu0 0.0
      %608 = vmatpush1.msra.mxu0 0.0
      %609 = vmatprep.subr.mxu0 0.0
      %610 = vmatpush1.msra.mxu0 0.0
      %611 = vmatprep.subr.mxu0 0.0
      %612 = vmatpush1.msra.mxu0 0.0
      %613 = vmatprep.subr.mxu0 0.0
      %614 = vmatpush1.msra.mxu0 0.0
      %615 = vmatprep.subr.mxu0 0.0
      %616 = vmatpush1.msra.mxu0 0.0
      %617 = vmatprep.subr.mxu0 0.0
      %618 = vmatpush1.msra.mxu0 0.0
      %619 = vmatprep.subr.mxu0 0.0
      %620 = vmatpush1.msra.mxu0 0.0
      %621 = vmatprep.subr.mxu0 0.0
      %622 = vmatpush1.msra.mxu0 %v507
      %623 = vmatprep.subr.mxu0 0.0
      %624 = vmatpush1.msra.mxu0 %v506
      %625 = vmatprep.subr.mxu0 0.0
      %626 = vmatpush1.msra.mxu0 %v505
      %627 = vmatprep.subr.mxu0 0.0
      %628 = vmatpush1.msra.mxu0 %v504
      %629 = vmatprep.subr.mxu0 0.0
      %630 = vmatpush1.msra.mxu0 %v503
      %631 = vmatprep.subr.mxu0 0.0
      %632 = vmatpush1.msra.mxu0 %v502
      %633 = vmatprep.subr.mxu0 0.0
      %634 = vmatpush1.msra.mxu0 %v501
      %635 = vmatprep.subr.mxu0 0.0
      %636 = vmatpush1.msra.mxu0 %v500
      %637 = vmatprep.subr.mxu0 0.0
      %638 = vmatpush1.msra.mxu0 %v499
      %639 = vmatprep.subr.mxu0 0.0
      %640 = vmatpush2.msra.mxu0 0.0
      %641 = vmatprep.subr.mxu0 0.0
      %642 = vmatpush2.msra.mxu0 0.0
      %643 = vmatprep.subr.mxu0 0.0
      %644 = vmatpush2.msra.mxu0 0.0
      %645 = vmatprep.subr.mxu0 0.0
      %646 = vmatpush2.msra.mxu0 0.0
      %647 = vmatprep.subr.mxu0 0.0
      %648 = vmatpush2.msra.mxu0 0.0
      %649 = vmatprep.subr.mxu0 0.0
      %650 = vmatpush2.msra.mxu0 0.0
      %651 = vmatprep.subr.mxu0 0.0
      %652 = vmatpush2.msra.mxu0 0.0
      %653 = vmatprep.subr.mxu0 0.0
      %654 = vmatpush2.msra.mxu0 0.0
      %655 = vmatprep.subr.mxu0 0.0
      %656 = vmatpush2.msra.mxu0 0.0
      %657 = vmatprep.subr.mxu0 0.0
      %658 = vmatpush2.msra.mxu0 0.0
      %659 = vmatprep.subr.mxu0 0.0
      %660 = vmatpush2.msra.mxu0 0.0
      %661 = vmatprep.subr.mxu0 0.0
      %662 = vmatpush2.msra.mxu0 0.0
      %663 = vmatprep.subr.mxu0 0.0
      %664 = vmatpush2.msra.mxu0 0.0
      %665 = vmatprep.subr.mxu0 0.0
      %666 = vmatpush2.msra.mxu0 0.0
      %667 = vmatprep.subr.mxu0 0.0
      %668 = vmatpush2.msra.mxu0 0.0
      %669 = vmatprep.subr.mxu0 0.0
      %670 = vmatpush2.msra.mxu0 0.0
      %671 = vmatprep.mubr.f32.mxu0 0.0
      %672 = vmatmul.mubr.f32.gmra.mxu0 %v602
      %v673 = vpop.f32.mrf.mxu0
      %v674 = vadd.f32 %v593, %v673
      %v675 = vpop.f32.mrf.mxu0
      %676 = vmatprep.mubr.f32.mxu0 0.0
      %677 = vmatmul.mubr.f32.gmra.mxu0 %v605
      %v678 = vpop.f32.mrf.mxu0
      %v679 = vadd.f32 %v598, %v678
      %v680 = vpop.f32.mrf.mxu0
      %681 = vdwg.mxu0
      %v682 = vld [vmem:[#allocation2 + $0x2] sm:$0xff]
      %v683 = vld [vmem:[#allocation2 + $0xa] sm:$0xff]
      %s684 = scalar_lea.vmem %s4, 144
      %v685 = vld [vmem:[%s684] sm:$0xff]
      %v686 = vld [vmem:[%s684 + $0x8] sm:$0xff]
      %v687 = vld [vmem:[%s684 + $0x10] sm:$0xff]
      %v688 = vld [vmem:[%s684 + $0x18] sm:$0xff]
      %v689 = vld [vmem:[%s684 + $0x20] sm:$0xff]
      %v690 = vld [vmem:[%s684 + $0x28] sm:$0xff]
      %v691 = vld [vmem:[%s684 + $0x30] sm:$0xff]
      %v692 = vld [vmem:[%s684 + $0x38] sm:$0xff]
      %v693 = vld [vmem:[%s684 + $0x40] sm:$0xff]
      %v695 = vsel %vm494, %v682, 0
      %v698 = vsel %vm494, %v683, 0
      %700 = vmatprep.subr.mxu0 0.0
      %701 = vmatpush1.msra.mxu0 0.0
      %702 = vmatprep.subr.mxu0 0.0
      %703 = vmatpush1.msra.mxu0 0.0
      %704 = vmatprep.subr.mxu0 0.0
      %705 = vmatpush1.msra.mxu0 0.0
      %706 = vmatprep.subr.mxu0 0.0
      %707 = vmatpush1.msra.mxu0 0.0
      %708 = vmatprep.subr.mxu0 0.0
      %709 = vmatpush1.msra.mxu0 0.0
      %710 = vmatprep.subr.mxu0 0.0
      %711 = vmatpush1.msra.mxu0 0.0
      %712 = vmatprep.subr.mxu0 0.0
      %713 = vmatpush1.msra.mxu0 0.0
      %714 = vmatprep.subr.mxu0 0.0
      %715 = vmatpush1.msra.mxu0 %v693
      %716 = vmatprep.subr.mxu0 0.0
      %717 = vmatpush1.msra.mxu0 %v692
      %718 = vmatprep.subr.mxu0 0.0
      %719 = vmatpush1.msra.mxu0 %v691
      %720 = vmatprep.subr.mxu0 0.0
      %721 = vmatpush1.msra.mxu0 %v690
      %722 = vmatprep.subr.mxu0 0.0
      %723 = vmatpush1.msra.mxu0 %v689
      %724 = vmatprep.subr.mxu0 0.0
      %725 = vmatpush1.msra.mxu0 %v688
      %726 = vmatprep.subr.mxu0 0.0
      %727 = vmatpush1.msra.mxu0 %v687
      %728 = vmatprep.subr.mxu0 0.0
      %729 = vmatpush1.msra.mxu0 %v686
      %730 = vmatprep.subr.mxu0 0.0
      %731 = vmatpush1.msra.mxu0 %v685
      %732 = vmatprep.subr.mxu0 0.0
      %733 = vmatpush2.msra.mxu0 0.0
      %734 = vmatprep.subr.mxu0 0.0
      %735 = vmatpush2.msra.mxu0 0.0
      %736 = vmatprep.subr.mxu0 0.0
      %737 = vmatpush2.msra.mxu0 0.0
      %738 = vmatprep.subr.mxu0 0.0
      %739 = vmatpush2.msra.mxu0 0.0
      %740 = vmatprep.subr.mxu0 0.0
      %741 = vmatpush2.msra.mxu0 0.0
      %742 = vmatprep.subr.mxu0 0.0
      %743 = vmatpush2.msra.mxu0 0.0
      %744 = vmatprep.subr.mxu0 0.0
      %745 = vmatpush2.msra.mxu0 0.0
      %746 = vmatprep.subr.mxu0 0.0
      %747 = vmatpush2.msra.mxu0 0.0
      %748 = vmatprep.subr.mxu0 0.0
      %749 = vmatpush2.msra.mxu0 0.0
      %750 = vmatprep.subr.mxu0 0.0
      %751 = vmatpush2.msra.mxu0 0.0
      %752 = vmatprep.subr.mxu0 0.0
      %753 = vmatpush2.msra.mxu0 0.0
      %754 = vmatprep.subr.mxu0 0.0
      %755 = vmatpush2.msra.mxu0 0.0
      %756 = vmatprep.subr.mxu0 0.0
      %757 = vmatpush2.msra.mxu0 0.0
      %758 = vmatprep.subr.mxu0 0.0
      %759 = vmatpush2.msra.mxu0 0.0
      %760 = vmatprep.subr.mxu0 0.0
      %761 = vmatpush2.msra.mxu0 0.0
      %762 = vmatprep.subr.mxu0 0.0
      %763 = vmatpush2.msra.mxu0 0.0
      %764 = vmatprep.mubr.f32.mxu0 0.0
      %765 = vmatmul.mubr.f32.gmra.mxu0 %v695
      %v766 = vpop.f32.mrf.mxu0
      %v767 = vadd.f32 0.0, %v766
      %v768 = vpop.f32.mrf.mxu0
      %769 = vmatprep.mubr.f32.mxu0 0.0
      %770 = vmatmul.mubr.f32.gmra.mxu0 %v698
      %v771 = vpop.f32.mrf.mxu0
      %v772 = vadd.f32 0.0, %v771
      %v773 = vpop.f32.mrf.mxu0
      %774 = vdwg.mxu0
      %v775 = vadd.f32 %v674, %v767
      %v776 = vadd.f32 %v679, %v772
      %v777 = vld [vmem:[%s5] sm:$0x1]
      %v779 = vlaneseq
      %v780 = vshrl.u32 %v779, 7
      %v781 = vsub.s32 0, %v780
      %v782 = vrot.slane %v777, %v781
      %v784 = vmul.f32 %v775, %v782
      %v785 = vmul.f32 %v776, %v782
      %v786 = vld [vmem:[%s6] sm:$0x1]
      %v788 = vlaneseq
      %v789 = vshrl.u32 %v788, 7
      %v790 = vsub.s32 0, %v789
      %v791 = vrot.slane %v786, %v790
      %v793 = vadd.f32 %v784, %v791
      %v794 = vadd.f32 %v785, %v791
      %v795 = vmax.f32 %v793, 0.0
      %v796 = vmax.f32 %v794, 0.0
      %v797 = vld [vmem:[%s7] sm:$0xff]
      %v798 = vld [vmem:[%s7 + $0x8] sm:$0xff]
      %v799 = vld [vmem:[%s7 + $0x10] sm:$0xff]
      %v800 = vld [vmem:[%s7 + $0x18] sm:$0xff]
      %v801 = vld [vmem:[%s7 + $0x20] sm:$0xff]
      %v802 = vld [vmem:[%s7 + $0x28] sm:$0xff]
      %v803 = vld [vmem:[%s7 + $0x30] sm:$0xff]
      %v804 = vld [vmem:[%s7 + $0x38] sm:$0xff]
      %v805 = vld [vmem:[%s7 + $0x40] sm:$0xff]
      %v806 = vld [vmem:[%s7 + $0x48] sm:$0xff]
      %v807 = vld [vmem:[%s7 + $0x50] sm:$0xff]
      %v808 = vld [vmem:[%s7 + $0x58] sm:$0xff]
      %v809 = vld [vmem:[%s7 + $0x60] sm:$0xff]
      %v810 = vld [vmem:[%s7 + $0x68] sm:$0xff]
      %v811 = vld [vmem:[%s7 + $0x70] sm:$0xff]
      %v812 = vld [vmem:[%s7 + $0x78] sm:$0xff]
      %vm813 = vcmask 523264
      %v815 = vsel %vm813, %v795, 0
      %v818 = vsel %vm813, %v796, 0
      %820 = vmatprep.subr.mxu0 0.0
      %821 = vmatpush1.msra.mxu0 0.0
      %822 = vmatprep.subr.mxu0 0.0
      %823 = vmatpush1.msra.mxu0 0.0
      %824 = vmatprep.subr.mxu0 0.0
      %825 = vmatpush1.msra.mxu0 0.0
      %826 = vmatprep.subr.mxu0 0.0
      %827 = vmatpush1.msra.mxu0 0.0
      %828 = vmatprep.subr.mxu0 0.0
      %829 = vmatpush1.msra.mxu0 0.0
      %830 = vmatprep.subr.mxu0 0.0
      %831 = vmatpush1.msra.mxu0 0.0
      %832 = vmatprep.subr.mxu0 0.0
      %833 = vmatpush1.msra.mxu0 0.0
      %834 = vmatprep.subr.mxu0 0.0
      %835 = vmatpush1.msra.mxu0 0.0
      %836 = vmatprep.subr.mxu0 %v812
      %837 = vmatpush1.msra.mxu0 %v811
      %838 = vmatprep.subr.mxu0 %v810
      %839 = vmatpush1.msra.mxu0 %v809
      %840 = vmatprep.subr.mxu0 %v808
      %841 = vmatpush1.msra.mxu0 %v807
      %842 = vmatprep.subr.mxu0 %v806
      %843 = vmatpush1.msra.mxu0 %v805
      %844 = vmatprep.subr.mxu0 %v804
      %845 = vmatpush1.msra.mxu0 %v803
      %846 = vmatprep.subr.mxu0 %v802
      %847 = vmatpush1.msra.mxu0 %v801
      %848 = vmatprep.subr.mxu0 %v800
      %849 = vmatpush1.msra.mxu0 %v799
      %850 = vmatprep.subr.mxu0 %v798
      %851 = vmatpush1.msra.mxu0 %v797
      %852 = vmatprep.subr.mxu0 0.0
      %853 = vmatpush2.msra.mxu0 0.0
      %854 = vmatprep.subr.mxu0 0.0
      %855 = vmatpush2.msra.mxu0 0.0
      %856 = vmatprep.subr.mxu0 0.0
      %857 = vmatpush2.msra.mxu0 0.0
      %858 = vmatprep.subr.mxu0 0.0
      %859 = vmatpush2.msra.mxu0 0.0
      %860 = vmatprep.subr.mxu0 0.0
      %861 = vmatpush2.msra.mxu0 0.0
      %862 = vmatprep.subr.mxu0 0.0
      %863 = vmatpush2.msra.mxu0 0.0
      %864 = vmatprep.subr.mxu0 0.0
      %865 = vmatpush2.msra.mxu0 0.0
      %866 = vmatprep.subr.mxu0 0.0
      %867 = vmatpush2.msra.mxu0 0.0
      %868 = vmatprep.subr.mxu0 0.0
      %869 = vmatpush2.msra.mxu0 0.0
      %870 = vmatprep.subr.mxu0 0.0
      %871 = vmatpush2.msra.mxu0 0.0
      %872 = vmatprep.subr.mxu0 0.0
      %873 = vmatpush2.msra.mxu0 0.0
      %874 = vmatprep.subr.mxu0 0.0
      %875 = vmatpush2.msra.mxu0 0.0
      %876 = vmatprep.subr.mxu0 0.0
      %877 = vmatpush2.msra.mxu0 0.0
      %878 = vmatprep.subr.mxu0 0.0
      %879 = vmatpush2.msra.mxu0 0.0
      %880 = vmatprep.subr.mxu0 0.0
      %881 = vmatpush2.msra.mxu0 0.0
      %882 = vmatprep.subr.mxu0 0.0
      %883 = vmatpush2.msra.mxu0 0.0
      %884 = vmatprep.mubr.f32.mxu0 0.0
      %885 = vmatmul.mubr.f32.gmra.mxu0 %v815
      %v886 = vpop.f32.mrf.mxu0
      %v887 = vadd.f32 0.0, %v886
      %v888 = vpop.f32.mrf.mxu0
      %v889 = vadd.f32 0.0, %v888
      %890 = vmatprep.mubr.f32.mxu0 0.0
      %891 = vmatmul.mubr.f32.gmra.mxu0 %v818
      %v892 = vpop.f32.mrf.mxu0
      %v893 = vadd.f32 0.0, %v892
      %v894 = vpop.f32.mrf.mxu0
      %v895 = vadd.f32 0.0, %v894
      %896 = vdwg.mxu0
      %v897 = vld [vmem:[%s8] sm:$0x3]
      %v899 = vlaneseq
      %v900 = vshrl.u32 %v899, 7
      %v901 = vsub.s32 0, %v900
      %v902 = vrot.slane %v897, %v901
      %v903 = vlaneseq
      %v904 = vshrl.u32 %v903, 7
      %v905 = vsub.s32 1, %v904
      %v906 = vrot.slane %v897, %v905
      %v909 = vmul.f32 %v887, %v902
      %v910 = vmul.f32 %v889, %v906
      %v911 = vmul.f32 %v893, %v902
      %v912 = vmul.f32 %v895, %v906
      %v913 = vld [vmem:[%s9] sm:$0x3]
      %v915 = vlaneseq
      %v916 = vshrl.u32 %v915, 7
      %v917 = vsub.s32 0, %v916
      %v918 = vrot.slane %v913, %v917
      %v919 = vlaneseq
      %v920 = vshrl.u32 %v919, 7
      %v921 = vsub.s32 1, %v920
      %v922 = vrot.slane %v913, %v921
      %v925 = vadd.f32 %v909, %v918
      %v926 = vadd.f32 %v910, %v922
      %v927 = vadd.f32 %v911, %v918
      %v928 = vadd.f32 %v912, %v922
      %v929 = vadd.f32 %v925, %v360
      %v930 = vadd.f32 %v926, %v361
      %v931 = vadd.f32 %v927, %v362
      %v932 = vadd.f32 %v928, %v363
      %v933 = vmax.f32 %v929, 0.0
      %v934 = vmax.f32 %v930, 0.0
      %v935 = vmax.f32 %v931, 0.0
      %v936 = vmax.f32 %v932, 0.0
      %937 = vst [vmem:[%s359] sm:$0xff] %v933
      %938 = vst [vmem:[%s359 + $0x8] sm:$0xff] %v934
      %939 = vst [vmem:[%s359 + $0x10] sm:$0xff] %v935
      %940 = vst [vmem:[%s359 + $0x18] sm:$0xff] %v936
      %p941 = scmp.lt.s32.totalorder %s21, 1
      %s942 = scalar_select %p941, %s21, 1
      %s943 = smul.addr %s942, 4
      %s944 = smul.addr %s943, 8
      %s945 = scalar_lea.vmem %s10, %s944
      // Predicated region
      $region61: #{bottleneck_forward.1} parent=59 // pred_check
        %p946 = pneg %p254
      $region62: #{bottleneck_forward.1} parent=59 // pred_check_branch
        %948 = sbr.rel (%p946) target = $region64
      $region63: #{bottleneck_forward.1} parent=59 // pred_region
        _
      $region64: #{bottleneck_forward.1} parent=59 // pred_fallthru
        _
    $region60: #{bottleneck_forward.1} parent=5 // pred_fallthru
      _
    %p949 = scmp.le.s32.totalorder 2, %s16
    // Predicated region
    $region65: #{bottleneck_forward.1} parent=5 // pred_check
      %p950 = pneg %p949
    $region66: #{bottleneck_forward.1} parent=5 // pred_check_branch
      %952 = sbr.rel (%p950) target = $region68
    $region67: #{bottleneck_forward.1} parent=5 // pred_region
      %s953 = ssub.s32 %s16, 2
      // Predicated region
      $region69: #{bottleneck_forward.1} parent=67 // pred_check
        %p954 = pneg %p260
      $region70: #{bottleneck_forward.1} parent=67 // pred_check_branch
        %956 = sbr.rel (%p954) target = $region72
      $region71: #{bottleneck_forward.1} parent=67 // pred_region
        %p957 = scmp.lt.s32.totalorder %s22, 1
        %s958 = scalar_select %p957, %s22, 1
        %s959 = smul.addr %s958, 4
        %s960 = smul.addr %s959, 8
        %s961 = scalar_lea.vmem %s10, %s960
      $region72: #{bottleneck_forward.1} parent=67 // pred_fallthru
        _
    $region68: #{bottleneck_forward.1} parent=5 // pred_fallthru
      _
  $region6: #{bottleneck_forward.1} parent=0 // loop_footer
    %s20 = sadd.s32 1, %s16
  $region7: #{bottleneck_forward.1} parent=0 // loop_footer_branch
    %15 = sbr.rel target = $region3
  $region8: #{bottleneck_forward.1} parent=0 // loop_exit
    _

</llo_original>
